<compile_context>
chip_gen: v7x
topology: tpu7x:2x2x1
jax: 0.10.0
libtpu: 0.0.40
codegen_flags: <defaults>
</compile_context>

<pallas_src>
import jax
import jax.numpy as jnp
from jax.experimental import pallas as pl
from jax.experimental.pallas import tpu as pltpu

EPS = 1e-5  # PyTorch LayerNorm default eps


def mlp_kernel(x_ref, w1_ref, b1_ref, g_ref, bt_ref, w2_ref, b2_ref, o_ref):
    # ---- Linear 1 : (tn, d_in) @ (d_in, d_hidden) + b1, f32 accumulation on MXU ----
    h = jnp.dot(x_ref[...], w1_ref[...],
                preferred_element_type=jnp.float32) + b1_ref[...]

    # ---- LayerNorm over hidden dim (per-row, biased variance, all f32) ----
    # Fused one-pass statistics: two independent lane reductions (overlap on XLU).
    d = h.shape[-1]
    s1 = jnp.sum(h, axis=-1, keepdims=True)
    s2 = jnp.sum(h * h, axis=-1, keepdims=True)
    mean = s1 * (1.0 / d)
    var = jnp.maximum(s2 * (1.0 / d) - mean * mean, 0.0)  # clamp tiny cancellation
    h = (h - mean) * jax.lax.rsqrt(var + EPS) * g_ref[...] + bt_ref[...]

    # ---- ReLU (f32) ----
    h = jnp.maximum(h, 0.0)

    # ---- Linear 2 : (tn, d_hidden) @ (d_hidden, d_out) + b2 ----
    # (the post-ReLU cast to the MXU dtype is the main source of bf16-path error)
    out = jnp.dot(h.astype(w2_ref.dtype), w2_ref[...],
                  preferred_element_type=jnp.float32) + b2_ref[...]
    o_ref[...] = out.astype(o_ref.dtype)


def _round_up(n, m):
    return (n + m - 1) // m * m


def mlp_forward(x, params, *, tile_n=1024, mxu_dtype=jnp.bfloat16,
                out_dtype=jnp.float32):
    """x: (N, d_in). params: w1 (d_in, d_h), b1/gamma/beta (1, d_h),
    w2 (d_h, d_out), b2 (1, d_out). Weights are stored (in, out) so x @ w == x @ W.T
    of the PyTorch layout."""
    N, d_in = x.shape
    d_hidden = params["w1"].shape[1]
    d_out = params["w2"].shape[1]

    # MXU operand dtype. Cast x once here (not per-tile in the kernel): halves its
    # HBM->VMEM bytes when bf16. LayerNorm params / biases stay f32 (tiny, resident).
    x = x.astype(mxu_dtype)
    w1 = params["w1"].astype(mxu_dtype)
    w2 = params["w2"].astype(mxu_dtype)
    b1 = params["b1"].astype(jnp.float32)
    gamma = params["gamma"].astype(jnp.float32)
    beta = params["beta"].astype(jnp.float32)
    b2 = params["b2"].astype(jnp.float32)

    # Row tile: multiple of 8 (sublane), large to amortize per-step overhead, but
    # capped so the row grid has >= 2 blocks whenever N >= 16 (v7x: 2 TensorCores).
    tn = max(8, min(tile_n, _round_up(pl.cdiv(N, 2), 8)))
    grid = (pl.cdiv(N, tn),)  # partial last block handled by Pallas (masked write)

    resident = lambda i: (0, 0)  # weights / affine params stay pinned in VMEM

    def build(weight_pipeline_mode):
        kw = {} if weight_pipeline_mode is None else dict(
            pipeline_mode=weight_pipeline_mode)
        return pl.pallas_call(
            mlp_kernel,
            out_shape=jax.ShapeDtypeStruct((N, d_out), out_dtype),
            grid_spec=pltpu.PrefetchScalarGridSpec(
                num_scalar_prefetch=0,
                grid=grid,
                in_specs=[
                    pl.BlockSpec((tn, d_in), lambda i: (i, 0)),       # x (pipelined)
                    pl.BlockSpec((d_in, d_hidden), resident, **kw),   # w1
                    pl.BlockSpec((1, d_hidden), resident, **kw),      # b1
                    pl.BlockSpec((1, d_hidden), resident, **kw),      # gamma
                    pl.BlockSpec((1, d_hidden), resident, **kw),      # beta
                    pl.BlockSpec((d_hidden, d_out), resident, **kw),  # w2
                    pl.BlockSpec((1, d_out), resident, **kw),         # b2
                ],
                out_specs=pl.BlockSpec((tn, d_out), lambda i: (i, 0)),
            ),
            compiler_params=pltpu.CompilerParams(
                dimension_semantics=("parallel",),
                vmem_limit_bytes=32 * 1024 * 1024,  # explicit; actual use is ~2 MiB here
            ),
        )

    args = (x, w1, b1, gamma, beta, w2, b2)
    try:
        # Single-buffer the grid-invariant operands (halves their VMEM footprint).
        return build(pl.Buffered(1))(*args)
    except Exception:
        # This JAX build rejects single-buffering via pipeline_mode -> fall back to
        # the default (double-buffered) resident specs; correctness is unchanged.
        return build(None)(*args)


# ----------------------- pure-JAX reference (for checking) -----------------------
def _ref_forward(x, p):
    h = x @ p["w1"] + p["b1"]
    mean = h.mean(-1, keepdims=True)
    var = ((h - mean) ** 2).mean(-1, keepdims=True)  # biased, matches LayerNorm
    h = (h - mean) / jnp.sqrt(var + EPS) * p["gamma"] + p["beta"]
    h = jnp.maximum(h, 0.0)
    return h @ p["w2"] + p["b2"]


# --------------------------------- main ---------------------------------
if __name__ == "__main__":
    # MLPLayer(input_dim=32, hidden_dim=128, output_dim=128) on 50 rows.
    # N=50 is deliberately NOT a multiple of the row tile so the partial-block
    # (masked write-back) path is exercised.
    N, d_in, d_hidden, d_out = 50, 32, 128, 128

    key = jax.random.PRNGKey(0)
    ks = jax.random.split(key, 7)

    def lin_init(kw, kb, fan_in, fan_out):
        # nn.Linear-style uniform(-1/sqrt(fan_in), 1/sqrt(fan_in)); weight stored (in, out)
        bound = 1.0 / (fan_in ** 0.5)
        w = jax.random.uniform(kw, (fan_in, fan_out), jnp.float32, -bound, bound)
        b = jax.random.uniform(kb, (1, fan_out), jnp.float32, -bound, bound)
        return w, b

    w1, b1 = lin_init(ks[0], ks[1], d_in, d_hidden)
    w2, b2 = lin_init(ks[2], ks[3], d_hidden, d_out)
    # LayerNorm affine defaults are ones/zeros in PyTorch; perturb deterministically
    # so the affine path is actually exercised.
    params = {
        "w1": w1, "b1": b1,
        "gamma": 1.0 + 0.1 * jax.random.normal(ks[4], (1, d_hidden), jnp.float32),
        "beta": 0.1 * jax.random.normal(ks[5], (1, d_hidden), jnp.float32),
        "w2": w2, "b2": b2,
    }
    x = jax.random.normal(ks[6], (N, d_in), jnp.float32)

    ref = _ref_forward(x, params)

    # f32 MXU operands + f32 output: check vs the pure-JAX reference. Tolerance
    # covers MXU mantissa-pass precision differences between XLA's default dot and
    # the Mosaic matmul (both f32-accumulated); real bugs (wrong variance, missing
    # bias, dropped ReLU) are orders of magnitude larger.
    out_f32 = jax.block_until_ready(
        mlp_forward(x, params, mxu_dtype=jnp.float32, out_dtype=jnp.float32))
    assert out_f32.shape == (N, d_out)
    assert bool(jnp.isfinite(out_f32).all())
    assert bool(jnp.allclose(out_f32, ref, atol=2e-2, rtol=2e-2)), \
        "f32 path mismatch vs reference"

    # Default path: bf16 MXU operands (x, w1, w2, post-ReLU activations) + bf16
    # output, f32 accumulation / LayerNorm — looser tolerance by construction.
    out_bf16 = jax.block_until_ready(mlp_forward(x, params, out_dtype=jnp.bfloat16))
    assert out_bf16.shape == (N, d_out) and out_bf16.dtype == jnp.bfloat16
    assert bool(jnp.allclose(out_bf16.astype(jnp.float32), ref, atol=1e-1, rtol=1e-1)), \
        "bf16 path mismatch vs reference"

    print("KERNEL_OK")
</pallas_src>

<mosaic_0001>
module attributes {stable_mosaic.version = 11 : i64} {
  func.func @mlp_kernel(%arg0: i32, %arg1: memref<32x32xf32, #tpu.memory_space<vmem>>, %arg2: memref<32x128xf32, #tpu.memory_space<vmem>>, %arg3: memref<1x128xf32, #tpu.memory_space<vmem>>, %arg4: memref<1x128xf32, #tpu.memory_space<vmem>>, %arg5: memref<1x128xf32, #tpu.memory_space<vmem>>, %arg6: memref<128x128xf32, #tpu.memory_space<vmem>>, %arg7: memref<1x128xf32, #tpu.memory_space<vmem>>, %arg8: memref<32x128xf32, #tpu.memory_space<vmem>>) attributes {dimension_semantics = [#tpu.dimension_semantics<parallel>], iteration_bounds = array<i64: 2>, scalar_prefetch = 0 : i64, scratch_operands = 0 : i64, tpu.core_type = #tpu.core_type<tc>, window_params = [{transform_indices = @transform_0, window_bounds = array<i64: 32, 32>}, {pipeline_mode = #tpu.pipeline_mode<synchronous>, transform_indices = @transform_1, window_bounds = array<i64: 32, 128>}, {pipeline_mode = #tpu.pipeline_mode<synchronous>, transform_indices = @transform_2, window_bounds = array<i64: 1, 128>}, {pipeline_mode = #tpu.pipeline_mode<synchronous>, transform_indices = @transform_3, window_bounds = array<i64: 1, 128>}, {pipeline_mode = #tpu.pipeline_mode<synchronous>, transform_indices = @transform_4, window_bounds = array<i64: 1, 128>}, {pipeline_mode = #tpu.pipeline_mode<synchronous>, transform_indices = @transform_5, window_bounds = array<i64: 128, 128>}, {pipeline_mode = #tpu.pipeline_mode<synchronous>, transform_indices = @transform_6, window_bounds = array<i64: 1, 128>}, {transform_indices = @transform_7, window_bounds = array<i64: 32, 128>}]} {
    %c0 = arith.constant 0 : index
    %c0_0 = arith.constant 0 : index
    %0 = vector.load %arg1[%c0, %c0_0] : memref<32x32xf32, #tpu.memory_space<vmem>>, vector<32x32xf32>
    %c0_1 = arith.constant 0 : index
    %c0_2 = arith.constant 0 : index
    %1 = vector.load %arg2[%c0_1, %c0_2] : memref<32x128xf32, #tpu.memory_space<vmem>>, vector<32x128xf32>
    %cst = arith.constant dense<0.000000e+00> : vector<32x128xf32>
    %2 = tpu.matmul %0, %1, %cst {dimension_numbers = #tpu.dot_dimension_numbers<[1], [0], [0], [1], [0, 0, 1, 1], [], []>} : vector<32x32xf32>, vector<32x128xf32>, vector<32x128xf32> -> vector<32x128xf32>
    %c0_3 = arith.constant 0 : index
    %c0_4 = arith.constant 0 : index
    %3 = vector.load %arg3[%c0_3, %c0_4] : memref<1x128xf32, #tpu.memory_space<vmem>>, vector<1x128xf32>
    %4 = vector.broadcast %3 : vector<1x128xf32> to vector<32x128xf32>
    %5 = arith.addf %2, %4 : vector<32x128xf32>
    %cst_5 = arith.constant dense<0.000000e+00> : vector<32xf32>
    %6 = vector.multi_reduction <add>, %5, %cst_5 [1] : vector<32x128xf32> to vector<32xf32>
    %7 = vector.shape_cast %6 : vector<32xf32> to vector<32x1xf32>
    %8 = arith.mulf %5, %5 : vector<32x128xf32>
    %cst_6 = arith.constant dense<0.000000e+00> : vector<32xf32>
    %9 = vector.multi_reduction <add>, %8, %cst_6 [1] : vector<32x128xf32> to vector<32xf32>
    %10 = vector.shape_cast %9 : vector<32xf32> to vector<32x1xf32>
    %cst_7 = arith.constant 7.812500e-03 : f32
    %11 = vector.broadcast %cst_7 : f32 to vector<32x1xf32>
    %12 = arith.mulf %7, %11 : vector<32x1xf32>
    %cst_8 = arith.constant 7.812500e-03 : f32
    %13 = vector.broadcast %cst_8 : f32 to vector<32x1xf32>
    %14 = arith.mulf %10, %13 : vector<32x1xf32>
    %15 = arith.mulf %12, %12 : vector<32x1xf32>
    %16 = arith.subf %14, %15 : vector<32x1xf32>
    %cst_9 = arith.constant 0.000000e+00 : f32
    %17 = vector.broadcast %cst_9 : f32 to vector<32x1xf32>
    %18 = arith.maximumf %16, %17 : vector<32x1xf32>
    %19 = vector.broadcast %12 : vector<32x1xf32> to vector<32x128xf32>
    %20 = arith.subf %5, %19 : vector<32x128xf32>
    %cst_10 = arith.constant 9.99999974E-6 : f32
    %21 = vector.broadcast %cst_10 : f32 to vector<32x1xf32>
    %22 = arith.addf %18, %21 : vector<32x1xf32>
    %23 = math.rsqrt %22 : vector<32x1xf32>
    %24 = vector.broadcast %23 : vector<32x1xf32> to vector<32x128xf32>
    %25 = arith.mulf %20, %24 : vector<32x128xf32>
    %c0_11 = arith.constant 0 : index
    %c0_12 = arith.constant 0 : index
    %26 = vector.load %arg4[%c0_11, %c0_12] : memref<1x128xf32, #tpu.memory_space<vmem>>, vector<1x128xf32>
    %27 = vector.broadcast %26 : vector<1x128xf32> to vector<32x128xf32>
    %28 = arith.mulf %25, %27 : vector<32x128xf32>
    %c0_13 = arith.constant 0 : index
    %c0_14 = arith.constant 0 : index
    %29 = vector.load %arg5[%c0_13, %c0_14] : memref<1x128xf32, #tpu.memory_space<vmem>>, vector<1x128xf32>
    %30 = vector.broadcast %29 : vector<1x128xf32> to vector<32x128xf32>
    %31 = arith.addf %28, %30 : vector<32x128xf32>
    %cst_15 = arith.constant 0.000000e+00 : f32
    %32 = vector.broadcast %cst_15 : f32 to vector<32x128xf32>
    %33 = arith.maximumf %31, %32 : vector<32x128xf32>
    %c0_16 = arith.constant 0 : index
    %c0_17 = arith.constant 0 : index
    %34 = vector.load %arg6[%c0_16, %c0_17] : memref<128x128xf32, #tpu.memory_space<vmem>>, vector<128x128xf32>
    %cst_18 = arith.constant dense<0.000000e+00> : vector<32x128xf32>
    %35 = tpu.matmul %33, %34, %cst_18 {dimension_numbers = #tpu.dot_dimension_numbers<[1], [0], [0], [1], [0, 0, 1, 1], [], []>} : vector<32x128xf32>, vector<128x128xf32>, vector<32x128xf32> -> vector<32x128xf32>
    %c0_19 = arith.constant 0 : index
    %c0_20 = arith.constant 0 : index
    %36 = vector.load %arg7[%c0_19, %c0_20] : memref<1x128xf32, #tpu.memory_space<vmem>>, vector<1x128xf32>
    %37 = vector.broadcast %36 : vector<1x128xf32> to vector<32x128xf32>
    %38 = arith.addf %35, %37 : vector<32x128xf32>
    %c0_21 = arith.constant 0 : index
    %c0_22 = arith.constant 0 : index
    %39 = vector.load %arg8[%c0_21, %c0_22] : memref<32x128xf32, #tpu.memory_space<vmem>>, vector<32x128xf32>
    tpu.vector_store %arg8[%c0_21, %c0_22], %38 {strides = array<i32>} : memref<32x128xf32, #tpu.memory_space<vmem>>, vector<32x128xf32>,
    return
  }
  func.func @transform_0(%arg0: i32) -> (i32, i32) {
    %c0_i32 = arith.constant 0 : i32
    %c0_i32_0 = arith.constant 0 : i32
    return %arg0, %c0_i32 : i32, i32
  }
  func.func @transform_1(%arg0: i32) -> (i32, i32) {
    %c0_i32 = arith.constant 0 : i32
    %c0_i32_0 = arith.constant 0 : i32
    %c0_i32_1 = arith.constant 0 : i32
    return %c0_i32, %c0_i32_0 : i32, i32
  }
  func.func @transform_2(%arg0: i32) -> (i32, i32) {
    %c0_i32 = arith.constant 0 : i32
    %c0_i32_0 = arith.constant 0 : i32
    %c0_i32_1 = arith.constant 0 : i32
    return %c0_i32, %c0_i32_0 : i32, i32
  }
  func.func @transform_3(%arg0: i32) -> (i32, i32) {
    %c0_i32 = arith.constant 0 : i32
    %c0_i32_0 = arith.constant 0 : i32
    %c0_i32_1 = arith.constant 0 : i32
    return %c0_i32, %c0_i32_0 : i32, i32
  }
  func.func @transform_4(%arg0: i32) -> (i32, i32) {
    %c0_i32 = arith.constant 0 : i32
    %c0_i32_0 = arith.constant 0 : i32
    %c0_i32_1 = arith.constant 0 : i32
    return %c0_i32, %c0_i32_0 : i32, i32
  }
  func.func @transform_5(%arg0: i32) -> (i32, i32) {
    %c0_i32 = arith.constant 0 : i32
    %c0_i32_0 = arith.constant 0 : i32
    %c0_i32_1 = arith.constant 0 : i32
    return %c0_i32, %c0_i32_0 : i32, i32
  }
  func.func @transform_6(%arg0: i32) -> (i32, i32) {
    %c0_i32 = arith.constant 0 : i32
    %c0_i32_0 = arith.constant 0 : i32
    %c0_i32_1 = arith.constant 0 : i32
    return %c0_i32, %c0_i32_0 : i32, i32
  }
  func.func @transform_7(%arg0: i32) -> (i32, i32) {
    %c0_i32 = arith.constant 0 : i32
    %c0_i32_0 = arith.constant 0 : i32
    return %arg0, %c0_i32 : i32, i32
  }
}

module attributes {stable_mosaic.version = 11 : i64} {
  func.func @mlp_kernel(%arg0: i32, %arg1: memref<32x32xf32, #tpu.memory_space<vmem>>, %arg2: memref<32x128xf32, #tpu.memory_space<vmem>>, %arg3: memref<1x128xf32, #tpu.memory_space<vmem>>, %arg4: memref<1x128xf32, #tpu.memory_space<vmem>>, %arg5: memref<1x128xf32, #tpu.memory_space<vmem>>, %arg6: memref<128x128xf32, #tpu.memory_space<vmem>>, %arg7: memref<1x128xf32, #tpu.memory_space<vmem>>, %arg8: memref<32x128xf32, #tpu.memory_space<vmem>>) attributes {dimension_semantics = [#tpu.dimension_semantics<parallel>], iteration_bounds = array<i64: 2>, scalar_prefetch = 0 : i64, scratch_operands = 0 : i64, tpu.core_type = #tpu.core_type<tc>, window_params = [{transform_indices = @transform_0, window_bounds = array<i64: 32, 32>}, {pipeline_mode = #tpu.pipeline_mode<synchronous>, transform_indices = @transform_1, window_bounds = array<i64: 32, 128>}, {pipeline_mode = #tpu.pipeline_mode<synchronous>, transform_indices = @transform_2, window_bounds = array<i64: 1, 128>}, {pipeline_mode = #tpu.pipeline_mode<synchronous>, transform_indices = @transform_3, window_bounds = array<i64: 1, 128>}, {pipeline_mode = #tpu.pipeline_mode<synchronous>, transform_indices = @transform_4, window_bounds = array<i64: 1, 128>}, {pipeline_mode = #tpu.pipeline_mode<synchronous>, transform_indices = @transform_5, window_bounds = array<i64: 128, 128>}, {pipeline_mode = #tpu.pipeline_mode<synchronous>, transform_indices = @transform_6, window_bounds = array<i64: 1, 128>}, {transform_indices = @transform_7, window_bounds = array<i64: 32, 128>}]} {
    %c0 = arith.constant 0 : index
    %c0_0 = arith.constant 0 : index
    %0 = vector.load %arg1[%c0, %c0_0] : memref<32x32xf32, #tpu.memory_space<vmem>>, vector<32x32xf32>
    %c0_1 = arith.constant 0 : index
    %c0_2 = arith.constant 0 : index
    %1 = vector.load %arg2[%c0_1, %c0_2] : memref<32x128xf32, #tpu.memory_space<vmem>>, vector<32x128xf32>
    %cst = arith.constant dense<0.000000e+00> : vector<32x128xf32>
    %2 = tpu.matmul %0, %1, %cst {dimension_numbers = #tpu.dot_dimension_numbers<[1], [0], [0], [1], [0, 0, 1, 1], [], []>} : vector<32x32xf32>, vector<32x128xf32>, vector<32x128xf32> -> vector<32x128xf32>
    %c0_3 = arith.constant 0 : index
    %c0_4 = arith.constant 0 : index
    %3 = vector.load %arg3[%c0_3, %c0_4] : memref<1x128xf32, #tpu.memory_space<vmem>>, vector<1x128xf32>
    %4 = vector.broadcast %3 : vector<1x128xf32> to vector<32x128xf32>
    %5 = arith.addf %2, %4 : vector<32x128xf32>
    %cst_5 = arith.constant dense<0.000000e+00> : vector<32xf32>
    %6 = vector.multi_reduction <add>, %5, %cst_5 [1] : vector<32x128xf32> to vector<32xf32>
    %7 = vector.shape_cast %6 : vector<32xf32> to vector<32x1xf32>
    %8 = arith.mulf %5, %5 : vector<32x128xf32>
    %cst_6 = arith.constant dense<0.000000e+00> : vector<32xf32>
    %9 = vector.multi_reduction <add>, %8, %cst_6 [1] : vector<32x128xf32> to vector<32xf32>
    %10 = vector.shape_cast %9 : vector<32xf32> to vector<32x1xf32>
    %cst_7 = arith.constant 7.812500e-03 : f32
    %11 = vector.broadcast %cst_7 : f32 to vector<32x1xf32>
    %12 = arith.mulf %7, %11 : vector<32x1xf32>
    %cst_8 = arith.constant 7.812500e-03 : f32
    %13 = vector.broadcast %cst_8 : f32 to vector<32x1xf32>
    %14 = arith.mulf %10, %13 : vector<32x1xf32>
    %15 = arith.mulf %12, %12 : vector<32x1xf32>
    %16 = arith.subf %14, %15 : vector<32x1xf32>
    %cst_9 = arith.constant 0.000000e+00 : f32
    %17 = vector.broadcast %cst_9 : f32 to vector<32x1xf32>
    %18 = arith.maximumf %16, %17 : vector<32x1xf32>
    %19 = vector.broadcast %12 : vector<32x1xf32> to vector<32x128xf32>
    %20 = arith.subf %5, %19 : vector<32x128xf32>
    %cst_10 = arith.constant 9.99999974E-6 : f32
    %21 = vector.broadcast %cst_10 : f32 to vector<32x1xf32>
    %22 = arith.addf %18, %21 : vector<32x1xf32>
    %23 = math.rsqrt %22 : vector<32x1xf32>
    %24 = vector.broadcast %23 : vector<32x1xf32> to vector<32x128xf32>
    %25 = arith.mulf %20, %24 : vector<32x128xf32>
    %c0_11 = arith.constant 0 : index
    %c0_12 = arith.constant 0 : index
    %26 = vector.load %arg4[%c0_11, %c0_12] : memref<1x128xf32, #tpu.memory_space<vmem>>, vector<1x128xf32>
    %27 = vector.broadcast %26 : vector<1x128xf32> to vector<32x128xf32>
    %28 = arith.mulf %25, %27 : vector<32x128xf32>
    %c0_13 = arith.constant 0 : index
    %c0_14 = arith.constant 0 : index
    %29 = vector.load %arg5[%c0_13, %c0_14] : memref<1x128xf32, #tpu.memory_space<vmem>>, vector<1x128xf32>
    %30 = vector.broadcast %29 : vector<1x128xf32> to vector<32x128xf32>
    %31 = arith.addf %28, %30 : vector<32x128xf32>
    %cst_15 = arith.constant 0.000000e+00 : f32
    %32 = vector.broadcast %cst_15 : f32 to vector<32x128xf32>
    %33 = arith.maximumf %31, %32 : vector<32x128xf32>
    %c0_16 = arith.constant 0 : index
    %c0_17 = arith.constant 0 : index
    %34 = vector.load %arg6[%c0_16, %c0_17] : memref<128x128xf32, #tpu.memory_space<vmem>>, vector<128x128xf32>
    %cst_18 = arith.constant dense<0.000000e+00> : vector<32x128xf32>
    %35 = tpu.matmul %33, %34, %cst_18 {dimension_numbers = #tpu.dot_dimension_numbers<[1], [0], [0], [1], [0, 0, 1, 1], [], []>} : vector<32x128xf32>, vector<128x128xf32>, vector<32x128xf32> -> vector<32x128xf32>
    %c0_19 = arith.constant 0 : index
    %c0_20 = arith.constant 0 : index
    %36 = vector.load %arg7[%c0_19, %c0_20] : memref<1x128xf32, #tpu.memory_space<vmem>>, vector<1x128xf32>
    %37 = vector.broadcast %36 : vector<1x128xf32> to vector<32x128xf32>
    %38 = arith.addf %35, %37 : vector<32x128xf32>
    %c0_21 = arith.constant 0 : index
    %c0_22 = arith.constant 0 : index
    %39 = vector.load %arg8[%c0_21, %c0_22] : memref<32x128xf32, #tpu.memory_space<vmem>>, vector<32x128xf32>
    tpu.vector_store %arg8[%c0_21, %c0_22], %38 {strides = array<i32>} : memref<32x128xf32, #tpu.memory_space<vmem>>, vector<32x128xf32>,
    return
  }
  func.func @transform_0(%arg0: i32) -> (i32, i32) {
    %c0_i32 = arith.constant 0 : i32
    %c0_i32_0 = arith.constant 0 : i32
    return %arg0, %c0_i32 : i32, i32
  }
  func.func @transform_1(%arg0: i32) -> (i32, i32) {
    %c0_i32 = arith.constant 0 : i32
    %c0_i32_0 = arith.constant 0 : i32
    %c0_i32_1 = arith.constant 0 : i32
    return %c0_i32, %c0_i32_0 : i32, i32
  }
  func.func @transform_2(%arg0: i32) -> (i32, i32) {
    %c0_i32 = arith.constant 0 : i32
    %c0_i32_0 = arith.constant 0 : i32
    %c0_i32_1 = arith.constant 0 : i32
    return %c0_i32, %c0_i32_0 : i32, i32
  }
  func.func @transform_3(%arg0: i32) -> (i32, i32) {
    %c0_i32 = arith.constant 0 : i32
    %c0_i32_0 = arith.constant 0 : i32
    %c0_i32_1 = arith.constant 0 : i32
    return %c0_i32, %c0_i32_0 : i32, i32
  }
  func.func @transform_4(%arg0: i32) -> (i32, i32) {
    %c0_i32 = arith.constant 0 : i32
    %c0_i32_0 = arith.constant 0 : i32
    %c0_i32_1 = arith.constant 0 : i32
    return %c0_i32, %c0_i32_0 : i32, i32
  }
  func.func @transform_5(%arg0: i32) -> (i32, i32) {
    %c0_i32 = arith.constant 0 : i32
    %c0_i32_0 = arith.constant 0 : i32
    %c0_i32_1 = arith.constant 0 : i32
    return %c0_i32, %c0_i32_0 : i32, i32
  }
  func.func @transform_6(%arg0: i32) -> (i32, i32) {
    %c0_i32 = arith.constant 0 : i32
    %c0_i32_0 = arith.constant 0 : i32
    %c0_i32_1 = arith.constant 0 : i32
    return %c0_i32, %c0_i32_0 : i32, i32
  }
  func.func @transform_7(%arg0: i32) -> (i32, i32) {
    %c0_i32 = arith.constant 0 : i32
    %c0_i32_0 = arith.constant 0 : i32
    return %arg0, %c0_i32 : i32, i32
  }
}

</mosaic_0001>

<llo_original>
// kernel: tpu_custom_call.1
$region0: #{tpu_custom_call.1}
  #allocation0 [shape = 'u32[]', space=smem, size = 0x4, offset = 0x4, fixed_abs, tag = 'smem constant byte address 0x4 - core index']
  #allocation1 [shape = 'u32[144,128]{1,0:T(1,128)}', space=vmem, size = 0x12000, scoped, tag = 'internal scratch']
  %s0 = inlined_call_operand.vmem [shape: f32[50,32], index: 0, kind: input, shape index: {}]
  %s1 = inlined_call_operand.vmem [shape: f32[32,128], index: 1, kind: input, shape index: {}]
  %s2 = inlined_call_operand.vmem [shape: f32[1,128], index: 2, kind: input, shape index: {}]
  %s3 = inlined_call_operand.vmem [shape: f32[1,128], index: 3, kind: input, shape index: {}]
  %s4 = inlined_call_operand.vmem [shape: f32[1,128], index: 4, kind: input, shape index: {}]
  %s5 = inlined_call_operand.hbm [shape: f32[128,128], index: 5, kind: input, shape index: {}]
  %s6 = inlined_call_operand.vmem [shape: f32[1,128], index: 6, kind: input, shape index: {}]
  %s7 = inlined_call_operand.hbm [shape: f32[50,128], index: 7, kind: output, shape index: {}]
  %s8 = sld [smem:[#allocation0]]
  $region65: #{tpu_custom_call.1} parent=0
    _
  %s10 = ssub.s32 1, %s8
  %s11 = scalar_select 0, %s10, %s8
  $region1: #{tpu_custom_call.1} parent=0
    #allocation2 [shape = 'u8[65536]{0}', space=vmem, size = 0x10000, scoped, tag = 'input window, operand 5, single buffered']
    #allocation3 [shape = 's32[2]{0}', space=sflag, size = 0x8, scoped, tag = 'scoped memory for tpu_custom_call.1']
    #allocation4 [shape = 's32[2]{0}', space=sflag, size = 0x8, scoped, tag = 'scoped memory for tpu_custom_call.1']
    #allocation5 [shape = 'u8[32768]{0}', space=vmem, size = 0x8000, scoped, tag = 'output window, operand 0']
    %12 = vsyncpa [#allocation3], 0
    %13 = vsyncpa [#allocation4], 0
    %s14 = scalar_lea.sflag [#allocation4], 1
    %15 = vsyncpa %s14, 0
    loop: start=0, step=1, limit=4
    $region2: #{tpu_custom_call.1} parent=1 // loop_pre_header
      _
    $region3: #{tpu_custom_call.1} parent=1 // loop_header
      %s17 = sphi 0, %s21
      %p18 = scmp.ge.s32.totalorder %s17, 4
      %s27 = sphi 0, %s29
      %s30 = sphi 0, %s27
      %s31 = sphi 0, %s30
      %s47 = sphi 0, %s31
      %s51 = sphi 0, %s51
      %s53 = sphi 0, %s51
      %s54 = sphi 0, %s53
      %s68 = sphi 0, %s54
      %s72 = sphi 0, %s72
      %s74 = sphi 0, %s72
      %s75 = sphi 0, %s74
      %s89 = sphi 0, %s75
      %s93 = sphi 0, %s93
      %s95 = sphi 0, %s93
      %s96 = sphi 0, %s95
      %s110 = sphi 0, %s96
      %s114 = sphi 0, %s114
      %s116 = sphi 0, %s114
      %s117 = sphi 0, %s116
      %s131 = sphi 0, %s117
      %s135 = sphi 0, %s135
      %s137 = sphi 0, %s135
      %s138 = sphi 0, %s137
      %s152 = sphi 0, %s138
      %s156 = sphi 0, %s156
      %s158 = sphi 0, %s156
      %s159 = sphi 0, %s158
      %s173 = sphi 0, %s159
      %s179 = sphi 0, %s181
      %s182 = sphi 0, %s179
      %s183 = sphi 0, %s182
      %s199 = sphi 0, %s183
    $region4: #{tpu_custom_call.1} parent=1 // loop_header_branch
      %20 = sbr.rel (%p18) target = $region8
    $region5: #{tpu_custom_call.1} parent=1 // loop_body
      %s22 = ssub.s32 %s17, 1
      %s23 = ssub.s32 %s17, 2
      %s24 = sadd.s32 %s17, 1
      %s25 = ssub.s32 %s17, %s24
      %p26 = scmp.eq.s32.totalorder %s25, 0
      %s28 = sadd.s32 %s27, 1
      %s29 = scalar_select %p26, %s27, %s28
      %p32 = pneg %p26
      %p33 = scmp.eq.s32.totalorder %s17, 1
      %p34 = por %p32, %p33
      %p35 = scmp.ne.s32.totalorder %s27, %s30
      %p36 = scmp.eq.s32.totalorder %s17, 0
      %p37 = por %p35, %p36
      %p38 = scmp.ne.s32.totalorder %s27, %s30
      %p39 = scmp.eq.s32.totalorder %s22, 1
      %p40 = por %p38, %p39
      %p41 = scmp.ne.s32.totalorder %s30, %s31
      %p42 = scmp.eq.s32.totalorder %s22, 0
      %p43 = por %p41, %p42
      %p44 = scmp.ne.s32.totalorder %s30, %s31
      %p45 = scmp.eq.s32.totalorder %s23, 1
      %p46 = por %p44, %p45
      %p48 = scmp.ne.s32.totalorder %s31, %s47
      %p49 = scmp.eq.s32.totalorder %s23, 0
      %p50 = por %p48, %p49
      %s52 = sadd.s32 %s51, 1
      %p55 = scmp.eq.s32.totalorder %s17, 1
      %p56 = scmp.ne.s32.totalorder %s51, %s53
      %p57 = scmp.eq.s32.totalorder %s17, 0
      %p58 = por %p56, %p57
      %p59 = scmp.ne.s32.totalorder %s51, %s53
      %p60 = scmp.eq.s32.totalorder %s22, 1
      %p61 = por %p59, %p60
      %p62 = scmp.ne.s32.totalorder %s53, %s54
      %p63 = scmp.eq.s32.totalorder %s22, 0
      %p64 = por %p62, %p63
      %p65 = scmp.ne.s32.totalorder %s53, %s54
      %p66 = scmp.eq.s32.totalorder %s23, 1
      %p67 = por %p65, %p66
      %p69 = scmp.ne.s32.totalorder %s54, %s68
      %p70 = scmp.eq.s32.totalorder %s23, 0
      %p71 = por %p69, %p70
      %s73 = sadd.s32 %s72, 1
      %p76 = scmp.eq.s32.totalorder %s17, 1
      %p77 = scmp.ne.s32.totalorder %s72, %s74
      %p78 = scmp.eq.s32.totalorder %s17, 0
      %p79 = por %p77, %p78
      %p80 = scmp.ne.s32.totalorder %s72, %s74
      %p81 = scmp.eq.s32.totalorder %s22, 1
      %p82 = por %p80, %p81
      %p83 = scmp.ne.s32.totalorder %s74, %s75
      %p84 = scmp.eq.s32.totalorder %s22, 0
      %p85 = por %p83, %p84
      %p86 = scmp.ne.s32.totalorder %s74, %s75
      %p87 = scmp.eq.s32.totalorder %s23, 1
      %p88 = por %p86, %p87
      %p90 = scmp.ne.s32.totalorder %s75, %s89
      %p91 = scmp.eq.s32.totalorder %s23, 0
      %p92 = por %p90, %p91
      %s94 = sadd.s32 %s93, 1
      %p97 = scmp.eq.s32.totalorder %s17, 1
      %p98 = scmp.ne.s32.totalorder %s93, %s95
      %p99 = scmp.eq.s32.totalorder %s17, 0
      %p100 = por %p98, %p99
      %p101 = scmp.ne.s32.totalorder %s93, %s95
      %p102 = scmp.eq.s32.totalorder %s22, 1
      %p103 = por %p101, %p102
      %p104 = scmp.ne.s32.totalorder %s95, %s96
      %p105 = scmp.eq.s32.totalorder %s22, 0
      %p106 = por %p104, %p105
      %p107 = scmp.ne.s32.totalorder %s95, %s96
      %p108 = scmp.eq.s32.totalorder %s23, 1
      %p109 = por %p107, %p108
      %p111 = scmp.ne.s32.totalorder %s96, %s110
      %p112 = scmp.eq.s32.totalorder %s23, 0
      %p113 = por %p111, %p112
      %s115 = sadd.s32 %s114, 1
      %p118 = scmp.eq.s32.totalorder %s17, 1
      %p119 = scmp.ne.s32.totalorder %s114, %s116
      %p120 = scmp.eq.s32.totalorder %s17, 0
      %p121 = por %p119, %p120
      %p122 = scmp.ne.s32.totalorder %s114, %s116
      %p123 = scmp.eq.s32.totalorder %s22, 1
      %p124 = por %p122, %p123
      %p125 = scmp.ne.s32.totalorder %s116, %s117
      %p126 = scmp.eq.s32.totalorder %s22, 0
      %p127 = por %p125, %p126
      %p128 = scmp.ne.s32.totalorder %s116, %s117
      %p129 = scmp.eq.s32.totalorder %s23, 1
      %p130 = por %p128, %p129
      %p132 = scmp.ne.s32.totalorder %s117, %s131
      %p133 = scmp.eq.s32.totalorder %s23, 0
      %p134 = por %p132, %p133
      %s136 = sadd.s32 %s135, 1
      %p139 = scmp.eq.s32.totalorder %s17, 1
      %p140 = scmp.ne.s32.totalorder %s135, %s137
      %p141 = scmp.eq.s32.totalorder %s17, 0
      %p142 = por %p140, %p141
      %p143 = scmp.ne.s32.totalorder %s135, %s137
      %p144 = scmp.eq.s32.totalorder %s22, 1
      %p145 = por %p143, %p144
      %p146 = scmp.ne.s32.totalorder %s137, %s138
      %p147 = scmp.eq.s32.totalorder %s22, 0
      %p148 = por %p146, %p147
      %p149 = scmp.ne.s32.totalorder %s137, %s138
      %p150 = scmp.eq.s32.totalorder %s23, 1
      %p151 = por %p149, %p150
      %p153 = scmp.ne.s32.totalorder %s138, %s152
      %p154 = scmp.eq.s32.totalorder %s23, 0
      %p155 = por %p153, %p154
      %s157 = sadd.s32 %s156, 1
      %p160 = scmp.eq.s32.totalorder %s17, 1
      %p161 = scmp.ne.s32.totalorder %s156, %s158
      %p162 = scmp.eq.s32.totalorder %s17, 0
      %p163 = por %p161, %p162
      %p164 = scmp.ne.s32.totalorder %s156, %s158
      %p165 = scmp.eq.s32.totalorder %s22, 1
      %p166 = por %p164, %p165
      %p167 = scmp.ne.s32.totalorder %s158, %s159
      %p168 = scmp.eq.s32.totalorder %s22, 0
      %p169 = por %p167, %p168
      %p170 = scmp.ne.s32.totalorder %s158, %s159
      %p171 = scmp.eq.s32.totalorder %s23, 1
      %p172 = por %p170, %p171
      %p174 = scmp.ne.s32.totalorder %s159, %s173
      %p175 = scmp.eq.s32.totalorder %s23, 0
      %p176 = por %p174, %p175
      %s177 = ssub.s32 %s17, %s24
      %p178 = scmp.eq.s32.totalorder %s177, 0
      %s180 = sadd.s32 %s179, 1
      %s181 = scalar_select %p178, %s179, %s180
      %p184 = pneg %p178
      %p185 = scmp.eq.s32.totalorder %s17, 1
      %p186 = por %p184, %p185
      %p187 = scmp.ne.s32.totalorder %s179, %s182
      %p188 = scmp.eq.s32.totalorder %s17, 0
      %p189 = por %p187, %p188
      %p190 = scmp.ne.s32.totalorder %s179, %s182
      %p191 = scmp.eq.s32.totalorder %s22, 1
      %p192 = por %p190, %p191
      %p193 = scmp.ne.s32.totalorder %s182, %s183
      %p194 = scmp.eq.s32.totalorder %s22, 0
      %p195 = por %p193, %p194
      %p196 = scmp.ne.s32.totalorder %s182, %s183
      %p197 = scmp.eq.s32.totalorder %s23, 1
      %p198 = por %p196, %p197
      %p200 = scmp.ne.s32.totalorder %s183, %s199
      %p201 = scmp.eq.s32.totalorder %s23, 0
      %p202 = por %p200, %p201
      %p203 = scmp.le.s32.totalorder 1, %s17
      %p204 = scmp.lt.s32.totalorder %s17, 3
      %p205 = pnand %p203, %p204
      %p206 = pneg %p205
      // Predicated region
      $region9: #{tpu_custom_call.1} parent=5 // pred_check
        _
      $region10: #{tpu_custom_call.1} parent=5 // pred_check_branch
        %208 = sbr.rel (%p205) target = $region12
      $region11: #{tpu_custom_call.1} parent=5 // pred_region
        %s209 = ssub.s32 %s17, 1
        // Predicated region
        $region13: #{tpu_custom_call.1} parent=11 // pred_check
          %p210 = pneg %p64
        $region14: #{tpu_custom_call.1} parent=11 // pred_check_branch
          %212 = sbr.rel (%p210) target = $region16
        $region15: #{tpu_custom_call.1} parent=11 // pred_region
          _
        $region16: #{tpu_custom_call.1} parent=11 // pred_fallthru
          _
        // Predicated region
        $region17: #{tpu_custom_call.1} parent=11 // pred_check
          %p213 = pneg %p85
        $region18: #{tpu_custom_call.1} parent=11 // pred_check_branch
          %215 = sbr.rel (%p213) target = $region20
        $region19: #{tpu_custom_call.1} parent=11 // pred_region
          _
        $region20: #{tpu_custom_call.1} parent=11 // pred_fallthru
          _
        // Predicated region
        $region21: #{tpu_custom_call.1} parent=11 // pred_check
          %p216 = pneg %p106
        $region22: #{tpu_custom_call.1} parent=11 // pred_check_branch
          %218 = sbr.rel (%p216) target = $region24
        $region23: #{tpu_custom_call.1} parent=11 // pred_region
          _
        $region24: #{tpu_custom_call.1} parent=11 // pred_fallthru
          _
        // Predicated region
        $region25: #{tpu_custom_call.1} parent=11 // pred_check
          %p219 = pneg %p127
        $region26: #{tpu_custom_call.1} parent=11 // pred_check_branch
          %221 = sbr.rel (%p219) target = $region28
        $region27: #{tpu_custom_call.1} parent=11 // pred_region
          _
        $region28: #{tpu_custom_call.1} parent=11 // pred_fallthru
          _
        // Predicated region
        $region29: #{tpu_custom_call.1} parent=11 // pred_check
          %p222 = pneg %p148
        $region30: #{tpu_custom_call.1} parent=11 // pred_check_branch
          %224 = sbr.rel (%p222) target = $region32
        $region31: #{tpu_custom_call.1} parent=11 // pred_region
          %s226 = ssub.s32 2048, 2048
          %227 = vsyncadd [#allocation3], %s226
          %s228 = sshll.u32 [#allocation2], 4
          %s229 = int_to_ptr.vmem [resolvable:$true] %s228
          %234 = dma.hbm_to_vmem [thread:$0]  %s5, 2048, %s229, [#allocation3], 128, 128, 8
        $region32: #{tpu_custom_call.1} parent=11 // pred_fallthru
          _
        // Predicated region
        $region33: #{tpu_custom_call.1} parent=11 // pred_check
          %p235 = pneg %p169
        $region34: #{tpu_custom_call.1} parent=11 // pred_check_branch
          %237 = sbr.rel (%p235) target = $region36
        $region35: #{tpu_custom_call.1} parent=11 // pred_region
          _
        $region36: #{tpu_custom_call.1} parent=11 // pred_fallthru
          _
      $region12: #{tpu_custom_call.1} parent=5 // pred_fallthru
        _
      %p238 = scmp.lt.s32.totalorder %s17, 2
      // Predicated region
      $region37: #{tpu_custom_call.1} parent=5 // pred_check
        %p239 = pneg %p238
      $region38: #{tpu_custom_call.1} parent=5 // pred_check_branch
        %241 = sbr.rel (%p239) target = $region40
      $region39: #{tpu_custom_call.1} parent=5 // pred_region
        // Predicated region
        $region41: #{tpu_custom_call.1} parent=39 // pred_check
          %p242 = pneg %p37
        $region42: #{tpu_custom_call.1} parent=39 // pred_check_branch
          %244 = sbr.rel (%p242) target = $region44
        $region43: #{tpu_custom_call.1} parent=39 // pred_region
          %s245 = smul.u32 4, %s17
          %s246 = ssub.s32 7, %s245
          %p247 = scmp.lt.s32.totalorder %s246, 4
          %s248 = scalar_select %p247, %s246, 4
          %s249 = smul.u32 128, %s248
          %p250 = scmp.lt.s32.totalorder %s245, 6
          %s251 = scalar_select %p250, %s245, 6
          %s252 = smul.addr %s251, 8
          %s253 = scalar_lea.vmem %s0, %s252
          %s254 = smul.u32 4, %s17
          %s255 = ssub.s32 7, %s254
          %p256 = scmp.lt.s32.totalorder %s255, 4
          %s257 = scalar_select %p256, %s255, 4
          %s258 = smul.u32 128, %s257
        $region44: #{tpu_custom_call.1} parent=39 // pred_fallthru
          _
      $region40: #{tpu_custom_call.1} parent=5 // pred_fallthru
        _
      %p259 = scmp.le.s32.totalorder 1, %s17
      %p260 = scmp.lt.s32.totalorder %s17, 3
      %p261 = pnand %p259, %p260
      %p262 = pneg %p261
      // Predicated region
      $region45: #{tpu_custom_call.1} parent=5 // pred_check
        _
      $region46: #{tpu_custom_call.1} parent=5 // pred_check_branch
        %264 = sbr.rel (%p261) target = $region48
      $region47: #{tpu_custom_call.1} parent=5 // pred_region
        %s265 = ssub.s32 %s17, 1
        // Predicated region
        $region49: #{tpu_custom_call.1} parent=47 // pred_check
          %p266 = pneg %p148
        $region50: #{tpu_custom_call.1} parent=47 // pred_check_branch
          %268 = sbr.rel (%p266) target = $region52
        $region51: #{tpu_custom_call.1} parent=47 // pred_region
          %269 = dma.done [#allocation3], 2048
        $region52: #{tpu_custom_call.1} parent=47 // pred_fallthru
          _
        %s270 = smul.u32 4, %s22
        %s271 = ssub.s32 7, %s270
        %p272 = scmp.lt.s32.totalorder %s271, 4
        %s273 = scalar_select %p272, %s271, 4
        %s274 = smul.u32 128, %s273
        %p275 = scmp.lt.s32.totalorder %s270, 6
        %s276 = scalar_select %p275, %s270, 6
        %s277 = smul.addr %s276, 8
        %s278 = scalar_lea.vmem %s0, %s277
        %p279 = pneg %p43
        %p280 = pneg %p40
        %p281 = pneg %p64
        %p282 = pneg %p61
        %p283 = pneg %p85
        %p284 = pneg %p82
        %p285 = pneg %p106
        %p286 = pneg %p103
        %p287 = pneg %p127
        %p288 = pneg %p124
        %p289 = pneg %p148
        %p290 = pneg %p145
        %p291 = pneg %p169
        %p292 = pneg %p166
        %p293 = pneg %p195
        %p294 = pneg %p192
        %s295 = sand.u32 %s182, 1
        %s296 = scalar_lea.sflag [#allocation4], %s295
        %s297 = sand.u32 %s182, 1
        %s298 = smul.addr %s297, 32
        %s299 = scalar_lea.vmem [#allocation5], %s298
        %s300 = smul.u32 4, %s22
        %s301 = ssub.s32 7, %s300
        %p302 = scmp.lt.s32.totalorder %s301, 4
        %s303 = scalar_select %p302, %s301, 4
        %s304 = smul.u32 128, %s303
        %p305 = scmp.lt.s32.totalorder %s300, 6
        %s306 = scalar_select %p305, %s300, 6
        %s307 = smul.addr %s306, 8
        %s308 = scalar_lea.vmem %s0, %s307
        %s309 = smul.u32 4, %s22
        %s310 = ssub.s32 7, %s309
        %p311 = scmp.lt.s32.totalorder %s310, 4
        %s312 = scalar_select %p311, %s310, 4
        %s313 = smul.u32 128, %s312
        %s314 = smul.u32 4, %s22
        %s315 = ssub.s32 7, %s314
        %p316 = scmp.lt.s32.totalorder %s315, 4
        %s317 = scalar_select %p316, %s315, 4
        %s318 = smul.u32 128, %s317
        %v319 = vld [vmem:[%s308] sm:$0xff]
        %v320 = vld [vmem:[%s308 + $0x8] sm:$0xff]
        %v321 = vld [vmem:[%s308 + $0x10] sm:$0xff]
        %v322 = vld [vmem:[%s308 + $0x18] sm:$0xff]
        %v323 = vld [vmem:[%s1] sm:$0xff]
        %v324 = vld [vmem:[%s1 + $0x8] sm:$0xff]
        %v325 = vld [vmem:[%s1 + $0x10] sm:$0xff]
        %v326 = vld [vmem:[%s1 + $0x18] sm:$0xff]
        %v327 = vld [vmem:[%s2] sm:$0x1]
        %v329 = vlaneseq
        %v330 = vshrl.u32 %v329, 7
        %v331 = vsub.s32 0, %v330
        %v332 = vrot.slane %v327, %v331
        %vm334 = vcmask 261120
        %v336 = vsel %vm334, %v319, 0
        %v339 = vsel %vm334, %v320, 0
        %v342 = vsel %vm334, %v321, 0
        %v345 = vsel %vm334, %v322, 0
        %347 = vmatprep.subr.mxu0 0.0
        %348 = vmatpush1.msra.mxu0 %v323
        %349 = vmatprep.subr.mxu0 0.0
        %350 = vmatpush1.msra.mxu0 %v324
        %351 = vmatprep.subr.mxu0 0.0
        %352 = vmatpush1.msra.mxu0 %v325
        %353 = vmatprep.subr.mxu0 0.0
        %354 = vmatpush1.msra.mxu0 %v326
        %355 = vmatprep.subr.mxu0 0.0
        %356 = vmatpush1.msra.mxu0 0.0
        %357 = vmatprep.subr.mxu0 0.0
        %358 = vmatpush1.msra.mxu0 0.0
        %359 = vmatprep.subr.mxu0 0.0
        %360 = vmatpush1.msra.mxu0 0.0
        %361 = vmatprep.subr.mxu0 0.0
        %362 = vmatpush1.msra.mxu0 0.0
        %363 = vmatprep.subr.mxu0 0.0
        %364 = vmatpush1.msra.mxu0 0.0
        %365 = vmatprep.subr.mxu0 0.0
        %366 = vmatpush1.msra.mxu0 0.0
        %367 = vmatprep.subr.mxu0 0.0
        %368 = vmatpush1.msra.mxu0 0.0
        %369 = vmatprep.subr.mxu0 0.0
        %370 = vmatpush1.msra.mxu0 0.0
        %371 = vmatprep.subr.mxu0 0.0
        %372 = vmatpush1.msra.mxu0 0.0
        %373 = vmatprep.subr.mxu0 0.0
        %374 = vmatpush1.msra.mxu0 0.0
        %375 = vmatprep.subr.mxu0 0.0
        %376 = vmatpush1.msra.mxu0 0.0
        %377 = vmatprep.subr.mxu0 0.0
        %378 = vmatpush1.msra.mxu0 0.0
        %379 = vmatprep.subr.mxu0 0.0
        %380 = vmatpush1.msra.mxu0 0.0
        %381 = vmatprep.subr.mxu0 0.0
        %382 = vmatpush1.msra.mxu0 0.0
        %383 = vmatprep.subr.mxu0 0.0
        %384 = vmatpush1.msra.mxu0 0.0
        %385 = vmatprep.subr.mxu0 0.0
        %386 = vmatpush1.msra.mxu0 0.0
        %387 = vmatprep.subr.mxu0 0.0
        %388 = vmatpush1.msra.mxu0 0.0
        %389 = vmatprep.subr.mxu0 0.0
        %390 = vmatpush1.msra.mxu0 0.0
        %391 = vmatprep.subr.mxu0 0.0
        %392 = vmatpush1.msra.mxu0 0.0
        %393 = vmatprep.subr.mxu0 0.0
        %394 = vmatpush1.msra.mxu0 0.0
        %395 = vmatprep.subr.mxu0 0.0
        %396 = vmatpush1.msra.mxu0 0.0
        %397 = vmatprep.subr.mxu0 0.0
        %398 = vmatpush1.msra.mxu0 0.0
        %399 = vmatprep.subr.mxu0 0.0
        %400 = vmatpush1.msra.mxu0 0.0
        %401 = vmatprep.subr.mxu0 0.0
        %402 = vmatpush1.msra.mxu0 0.0
        %403 = vmatprep.subr.mxu0 0.0
        %404 = vmatpush1.msra.mxu0 0.0
        %405 = vmatprep.subr.mxu0 0.0
        %406 = vmatpush1.msra.mxu0 0.0
        %407 = vmatprep.subr.mxu0 0.0
        %408 = vmatpush1.msra.mxu0 0.0
        %409 = vmatprep.subr.mxu0 0.0
        %410 = vmatpush1.msra.mxu0 0.0
        %411 = vmatprep.mubr.f32.mxu0 0.0
        %412 = vmatmul.mubr.f32.gmra.mrb[0].mxu0 %v336
        %v413 = vpop.f32.mrb[0].mxu0
        %v414 = vadd.f32 %v332, %v413
        %v415 = vpop.f32.mrb[0].mxu0
        %416 = vmatprep.mubr.f32.mxu0 0.0
        %417 = vmatmul.mubr.f32.gmra.mrb[0].mxu0 %v339
        %v418 = vpop.f32.mrb[0].mxu0
        %v419 = vadd.f32 %v332, %v418
        %v420 = vpop.f32.mrb[0].mxu0
        %421 = vmatprep.mubr.f32.mxu0 0.0
        %422 = vmatmul.mubr.f32.gmra.mrb[0].mxu0 %v342
        %v423 = vpop.f32.mrb[0].mxu0
        %v424 = vadd.f32 %v332, %v423
        %v425 = vpop.f32.mrb[0].mxu0
        %426 = vmatprep.mubr.f32.mxu0 0.0
        %427 = vmatmul.mubr.f32.gmra.mrb[0].mxu0 %v345
        %v428 = vpop.f32.mrb[0].mxu0
        %v429 = vadd.f32 %v332, %v428
        %v430 = vpop.f32.mrb[0].mxu0
        %431 = vdwg.mxu0
        %432 = vadd.xlane.f32.xlu0 %v414
        %v433 = vpop.xlane.xlu0 %432
        %434 = vadd.xlane.f32.xlu0 %v419
        %v435 = vpop.xlane.xlu0 %434
        %436 = vadd.xlane.f32.xlu0 %v424
        %v437 = vpop.xlane.xlu0 %436
        %438 = vadd.xlane.f32.xlu0 %v429
        %v439 = vpop.xlane.xlu0 %438
        %v440 = vmul.f32 %v414, %v414
        %v441 = vmul.f32 %v419, %v419
        %v442 = vmul.f32 %v424, %v424
        %v443 = vmul.f32 %v429, %v429
        %444 = vadd.xlane.f32.xlu0 %v440
        %v445 = vpop.xlane.xlu0 %444
        %446 = vadd.xlane.f32.xlu0 %v441
        %v447 = vpop.xlane.xlu0 %446
        %448 = vadd.xlane.f32.xlu0 %v442
        %v449 = vpop.xlane.xlu0 %448
        %450 = vadd.xlane.f32.xlu0 %v443
        %v451 = vpop.xlane.xlu0 %450
        %v452 = vmul.f32 %v433, 0.0078125
        %v453 = vmul.f32 %v435, 0.0078125
        %v454 = vmul.f32 %v437, 0.0078125
        %v455 = vmul.f32 %v439, 0.0078125
        %v456 = vmul.f32 %v445, 0.0078125
        %v457 = vmul.f32 %v447, 0.0078125
        %v458 = vmul.f32 %v449, 0.0078125
        %v459 = vmul.f32 %v451, 0.0078125
        %v460 = vmul.f32 %v452, %v452
        %v461 = vmul.f32 %v453, %v453
        %v462 = vmul.f32 %v454, %v454
        %v463 = vmul.f32 %v455, %v455
        %v464 = vsub.f32 %v456, %v460
        %v465 = vsub.f32 %v457, %v461
        %v466 = vsub.f32 %v458, %v462
        %v467 = vsub.f32 %v459, %v463
        %v468 = vmax.f32 %v464, 0.0
        %v469 = vmax.f32 %v465, 0.0
        %v470 = vmax.f32 %v466, 0.0
        %v471 = vmax.f32 %v467, 0.0
        %v472 = vsub.f32 %v414, %v452
        %v473 = vsub.f32 %v419, %v453
        %v474 = vsub.f32 %v424, %v454
        %v475 = vsub.f32 %v429, %v455
        %v476 = vadd.f32 %v468, 1e-05
        %v477 = vadd.f32 %v469, 1e-05
        %v478 = vadd.f32 %v470, 1e-05
        %v479 = vadd.f32 %v471, 1e-05
        %v480 = vrsqrt.pop %v476
        %v481 = vrsqrt.pop %v477
        %v482 = vrsqrt.pop %v478
        %v483 = vrsqrt.pop %v479
        %v484 = vmul.f32 %v472, %v480
        %v485 = vmul.f32 %v473, %v481
        %v486 = vmul.f32 %v474, %v482
        %v487 = vmul.f32 %v475, %v483
        %v488 = vld [vmem:[%s3] sm:$0x1]
        %v490 = vlaneseq
        %v491 = vshrl.u32 %v490, 7
        %v492 = vsub.s32 0, %v491
        %v493 = vrot.slane %v488, %v492
        %v495 = vmul.f32 %v484, %v493
        %v496 = vmul.f32 %v485, %v493
        %v497 = vmul.f32 %v486, %v493
        %v498 = vmul.f32 %v487, %v493
        %v499 = vld [vmem:[%s4] sm:$0x1]
        %v501 = vlaneseq
        %v502 = vshrl.u32 %v501, 7
        %v503 = vsub.s32 0, %v502
        %v504 = vrot.slane %v499, %v503
        %v506 = vadd.f32 %v495, %v504
        %v507 = vadd.f32 %v496, %v504
        %v508 = vadd.f32 %v497, %v504
        %v509 = vadd.f32 %v498, %v504
        %v510 = vmax.f32 %v506, 0.0
        %v511 = vmax.f32 %v507, 0.0
        %v512 = vmax.f32 %v508, 0.0
        %v513 = vmax.f32 %v509, 0.0
        %v514 = vld [vmem:[#allocation2] sm:$0xff]
        %v515 = vld [vmem:[#allocation2 + $0x8] sm:$0xff]
        %v516 = vld [vmem:[#allocation2 + $0x10] sm:$0xff]
        %v517 = vld [vmem:[#allocation2 + $0x18] sm:$0xff]
        %v518 = vld [vmem:[#allocation2 + $0x20] sm:$0xff]
        %v519 = vld [vmem:[#allocation2 + $0x28] sm:$0xff]
        %v520 = vld [vmem:[#allocation2 + $0x30] sm:$0xff]
        %v521 = vld [vmem:[#allocation2 + $0x38] sm:$0xff]
        %v522 = vld [vmem:[#allocation2 + $0x40] sm:$0xff]
        %v523 = vld [vmem:[#allocation2 + $0x48] sm:$0xff]
        %v524 = vld [vmem:[#allocation2 + $0x50] sm:$0xff]
        %v525 = vld [vmem:[#allocation2 + $0x58] sm:$0xff]
        %v526 = vld [vmem:[#allocation2 + $0x60] sm:$0xff]
        %v527 = vld [vmem:[#allocation2 + $0x68] sm:$0xff]
        %v528 = vld [vmem:[#allocation2 + $0x70] sm:$0xff]
        %v529 = vld [vmem:[#allocation2 + $0x78] sm:$0xff]
        %v530 = vld [vmem:[%s6] sm:$0x1]
        %v532 = vlaneseq
        %v533 = vshrl.u32 %v532, 7
        %v534 = vsub.s32 0, %v533
        %v535 = vrot.slane %v530, %v534
        %537 = vmatprep.subr.mxu0 0.0
        %538 = vmatpush1.msra.mxu0 %v514
        %539 = vmatprep.subr.mxu0 0.0
        %540 = vmatpush1.msra.mxu0 %v515
        %541 = vmatprep.subr.mxu0 0.0
        %542 = vmatpush1.msra.mxu0 %v516
        %543 = vmatprep.subr.mxu0 0.0
        %544 = vmatpush1.msra.mxu0 %v517
        %545 = vmatprep.subr.mxu0 0.0
        %546 = vmatpush1.msra.mxu0 %v518
        %547 = vmatprep.subr.mxu0 0.0
        %548 = vmatpush1.msra.mxu0 %v519
        %549 = vmatprep.subr.mxu0 0.0
        %550 = vmatpush1.msra.mxu0 %v520
        %551 = vmatprep.subr.mxu0 0.0
        %552 = vmatpush1.msra.mxu0 %v521
        %553 = vmatprep.subr.mxu0 0.0
        %554 = vmatpush1.msra.mxu0 %v522
        %555 = vmatprep.subr.mxu0 0.0
        %556 = vmatpush1.msra.mxu0 %v523
        %557 = vmatprep.subr.mxu0 0.0
        %558 = vmatpush1.msra.mxu0 %v524
        %559 = vmatprep.subr.mxu0 0.0
        %560 = vmatpush1.msra.mxu0 %v525
        %561 = vmatprep.subr.mxu0 0.0
        %562 = vmatpush1.msra.mxu0 %v526
        %563 = vmatprep.subr.mxu0 0.0
        %564 = vmatpush1.msra.mxu0 %v527
        %565 = vmatprep.subr.mxu0 0.0
        %566 = vmatpush1.msra.mxu0 %v528
        %567 = vmatprep.subr.mxu0 0.0
        %568 = vmatpush1.msra.mxu0 %v529
        %569 = vmatprep.subr.mxu0 0.0
        %570 = vmatpush1.msra.mxu0 0.0
        %571 = vmatprep.subr.mxu0 0.0
        %572 = vmatpush1.msra.mxu0 0.0
        %573 = vmatprep.subr.mxu0 0.0
        %574 = vmatpush1.msra.mxu0 0.0
        %575 = vmatprep.subr.mxu0 0.0
        %576 = vmatpush1.msra.mxu0 0.0
        %577 = vmatprep.subr.mxu0 0.0
        %578 = vmatpush1.msra.mxu0 0.0
        %579 = vmatprep.subr.mxu0 0.0
        %580 = vmatpush1.msra.mxu0 0.0
        %581 = vmatprep.subr.mxu0 0.0
        %582 = vmatpush1.msra.mxu0 0.0
        %583 = vmatprep.subr.mxu0 0.0
        %584 = vmatpush1.msra.mxu0 0.0
        %585 = vmatprep.subr.mxu0 0.0
        %586 = vmatpush1.msra.mxu0 0.0
        %587 = vmatprep.subr.mxu0 0.0
        %588 = vmatpush1.msra.mxu0 0.0
        %589 = vmatprep.subr.mxu0 0.0
        %590 = vmatpush1.msra.mxu0 0.0
        %591 = vmatprep.subr.mxu0 0.0
        %592 = vmatpush1.msra.mxu0 0.0
        %593 = vmatprep.subr.mxu0 0.0
        %594 = vmatpush1.msra.mxu0 0.0
        %595 = vmatprep.subr.mxu0 0.0
        %596 = vmatpush1.msra.mxu0 0.0
        %597 = vmatprep.subr.mxu0 0.0
        %598 = vmatpush1.msra.mxu0 0.0
        %599 = vmatprep.subr.mxu0 0.0
        %600 = vmatpush1.msra.mxu0 0.0
        %601 = vmatprep.mubr.f32.mxu0 0.0
        %602 = vmatmul.mubr.f32.gmra.mrb[0].mxu0 %v510
        %v603 = vpop.f32.mrb[0].mxu0
        %v604 = vadd.f32 %v535, %v603
        %v605 = vpop.f32.mrb[0].mxu0
        %606 = vmatprep.mubr.f32.mxu0 0.0
        %607 = vmatmul.mubr.f32.gmra.mrb[0].mxu0 %v511
        %v608 = vpop.f32.mrb[0].mxu0
        %v609 = vadd.f32 %v535, %v608
        %v610 = vpop.f32.mrb[0].mxu0
        %611 = vmatprep.mubr.f32.mxu0 0.0
        %612 = vmatmul.mubr.f32.gmra.mrb[0].mxu0 %v512
        %v613 = vpop.f32.mrb[0].mxu0
        %v614 = vadd.f32 %v535, %v613
        %v615 = vpop.f32.mrb[0].mxu0
        %616 = vmatprep.mubr.f32.mxu0 0.0
        %617 = vmatmul.mubr.f32.gmra.mrb[0].mxu0 %v513
        %v618 = vpop.f32.mrb[0].mxu0
        %v619 = vadd.f32 %v535, %v618
        %v620 = vpop.f32.mrb[0].mxu0
        %621 = vdwg.mxu0
        %622 = vst [vmem:[%s299] sm:$0xff] %v604
        %623 = vst [vmem:[%s299 + $0x8] sm:$0xff] %v609
        %624 = vst [vmem:[%s299 + $0x10] sm:$0xff] %v614
        %625 = vst [vmem:[%s299 + $0x18] sm:$0xff] %v619
        %s626 = sand.u32 %s182, 1
        %s627 = scalar_lea.sflag [#allocation4], %s626
        %s628 = sand.u32 %s182, 1
        %s629 = smul.addr %s628, 32
        %s630 = scalar_lea.vmem [#allocation5], %s629
        // Predicated region
        $region53: #{tpu_custom_call.1} parent=47 // pred_check
          %p631 = pneg %p192
        $region54: #{tpu_custom_call.1} parent=47 // pred_check_branch
          %633 = sbr.rel (%p631) target = $region56
        $region55: #{tpu_custom_call.1} parent=47 // pred_region
          %s634 = smul.u32 4, %s22
          %s635 = ssub.s32 7, %s634
          %p636 = scmp.lt.s32.totalorder %s635, 4
          %s637 = scalar_select %p636, %s635, 4
          %s638 = smul.u32 128, %s637
          %s640 = ssub.s32 512, %s638
          %641 = vsyncadd %s627, %s640
          %p642 = scmp.ne.s32.totalorder 0, %s638
          %s643 = smul.addr %s634, 128
          %s644 = scalar_lea.hbm %s7, %s643
          %s645 = smul.u32 8, %s637
          %s646 = sshll.u32 %s630, 4
          %s647 = int_to_ptr.vmem [resolvable:$true] %s646
          %s648 = sshll.u32 %s645, 4
          %652 = dma.vmem_to_hbm [thread:$0]  (%p642), %s647, %s648, %s644, %s627, 128, 128, 8
        $region56: #{tpu_custom_call.1} parent=47 // pred_fallthru
          _
      $region48: #{tpu_custom_call.1} parent=5 // pred_fallthru
        _
      %p653 = scmp.le.s32.totalorder 2, %s17
      // Predicated region
      $region57: #{tpu_custom_call.1} parent=5 // pred_check
        %p654 = pneg %p653
      $region58: #{tpu_custom_call.1} parent=5 // pred_check_branch
        %656 = sbr.rel (%p654) target = $region60
      $region59: #{tpu_custom_call.1} parent=5 // pred_region
        %s657 = ssub.s32 %s17, 2
        // Predicated region
        $region61: #{tpu_custom_call.1} parent=59 // pred_check
          %p658 = pneg %p198
        $region62: #{tpu_custom_call.1} parent=59 // pred_check_branch
          %660 = sbr.rel (%p658) target = $region64
        $region63: #{tpu_custom_call.1} parent=59 // pred_region
          %s661 = sand.u32 %s183, 1
          %s662 = scalar_lea.sflag [#allocation4], %s661
          %s663 = sand.u32 %s183, 1
          %s664 = smul.addr %s663, 32
          %s665 = scalar_lea.vmem [#allocation5], %s664
          %666 = dma.done %s662, 512
        $region64: #{tpu_custom_call.1} parent=59 // pred_fallthru
          _
      $region60: #{tpu_custom_call.1} parent=5 // pred_fallthru
        _
    $region6: #{tpu_custom_call.1} parent=1 // loop_footer
      %s21 = sadd.s32 1, %s17
    $region7: #{tpu_custom_call.1} parent=1 // loop_footer_branch
      %16 = sbr.rel target = $region3
    $region8: #{tpu_custom_call.1} parent=1 // loop_exit
      _
    %667 = vsyncpa [#allocation3], 1
    %s668 = scalar_lea.sflag [#allocation3], 1
    %669 = vsyncpa %s668, 1
    %670 = vsyncpa [#allocation4], 1
    %s671 = scalar_lea.sflag [#allocation4], 1
    %672 = vsyncpa %s671, 1

// kernel: tpu_custom_call.1
$region0: #{tpu_custom_call.1}
  #allocation0 [shape = 'u32[]', space=smem, size = 0x4, offset = 0x4, fixed_abs, tag = 'smem constant byte address 0x4 - core index']
  #allocation1 [shape = 'u32[144,128]{1,0:T(1,128)}', space=vmem, size = 0x12000, scoped, tag = 'internal scratch']
  %s0 = inlined_call_operand.vmem [shape: f32[50,32], index: 0, kind: input, shape index: {}]
  %s1 = inlined_call_operand.vmem [shape: f32[32,128], index: 1, kind: input, shape index: {}]
  %s2 = inlined_call_operand.vmem [shape: f32[1,128], index: 2, kind: input, shape index: {}]
  %s3 = inlined_call_operand.vmem [shape: f32[1,128], index: 3, kind: input, shape index: {}]
  %s4 = inlined_call_operand.vmem [shape: f32[1,128], index: 4, kind: input, shape index: {}]
  %s5 = inlined_call_operand.hbm [shape: f32[128,128], index: 5, kind: input, shape index: {}]
  %s6 = inlined_call_operand.vmem [shape: f32[1,128], index: 6, kind: input, shape index: {}]
  %s7 = inlined_call_operand.hbm [shape: f32[50,128], index: 7, kind: output, shape index: {}]
  %s8 = sld [smem:[#allocation0]]
  $region65: #{tpu_custom_call.1} parent=0
    _
  %s10 = ssub.s32 1, %s8
  %s11 = scalar_select 0, %s10, %s8
  $region1: #{tpu_custom_call.1} parent=0
    #allocation2 [shape = 'u8[65536]{0}', space=vmem, size = 0x10000, scoped, tag = 'input window, operand 5, single buffered']
    #allocation3 [shape = 's32[2]{0}', space=sflag, size = 0x8, scoped, tag = 'scoped memory for tpu_custom_call.1']
    #allocation4 [shape = 's32[2]{0}', space=sflag, size = 0x8, scoped, tag = 'scoped memory for tpu_custom_call.1']
    #allocation5 [shape = 'u8[32768]{0}', space=vmem, size = 0x8000, scoped, tag = 'output window, operand 0']
    %12 = vsyncpa [#allocation3], 0
    %13 = vsyncpa [#allocation4], 0
    %s14 = scalar_lea.sflag [#allocation4], 1
    %15 = vsyncpa %s14, 0
    loop: start=0, step=1, limit=4
    $region2: #{tpu_custom_call.1} parent=1 // loop_pre_header
      _
    $region3: #{tpu_custom_call.1} parent=1 // loop_header
      %s17 = sphi 0, %s21
      %p18 = scmp.ge.s32.totalorder %s17, 4
      %s27 = sphi 0, %s29
      %s30 = sphi 0, %s27
      %s31 = sphi 0, %s30
      %s47 = sphi 0, %s31
      %s51 = sphi 0, %s51
      %s53 = sphi 0, %s51
      %s54 = sphi 0, %s53
      %s68 = sphi 0, %s54
      %s72 = sphi 0, %s72
      %s74 = sphi 0, %s72
      %s75 = sphi 0, %s74
      %s89 = sphi 0, %s75
      %s93 = sphi 0, %s93
      %s95 = sphi 0, %s93
      %s96 = sphi 0, %s95
      %s110 = sphi 0, %s96
      %s114 = sphi 0, %s114
      %s116 = sphi 0, %s114
      %s117 = sphi 0, %s116
      %s131 = sphi 0, %s117
      %s135 = sphi 0, %s135
      %s137 = sphi 0, %s135
      %s138 = sphi 0, %s137
      %s152 = sphi 0, %s138
      %s156 = sphi 0, %s156
      %s158 = sphi 0, %s156
      %s159 = sphi 0, %s158
      %s173 = sphi 0, %s159
      %s179 = sphi 0, %s181
      %s182 = sphi 0, %s179
      %s183 = sphi 0, %s182
      %s199 = sphi 0, %s183
    $region4: #{tpu_custom_call.1} parent=1 // loop_header_branch
      %20 = sbr.rel (%p18) target = $region8
    $region5: #{tpu_custom_call.1} parent=1 // loop_body
      %s22 = ssub.s32 %s17, 1
      %s23 = ssub.s32 %s17, 2
      %s24 = sadd.s32 %s17, 1
      %s25 = ssub.s32 %s17, %s24
      %p26 = scmp.eq.s32.totalorder %s25, 0
      %s28 = sadd.s32 %s27, 1
      %s29 = scalar_select %p26, %s27, %s28
      %p32 = pneg %p26
      %p33 = scmp.eq.s32.totalorder %s17, 1
      %p34 = por %p32, %p33
      %p35 = scmp.ne.s32.totalorder %s27, %s30
      %p36 = scmp.eq.s32.totalorder %s17, 0
      %p37 = por %p35, %p36
      %p38 = scmp.ne.s32.totalorder %s27, %s30
      %p39 = scmp.eq.s32.totalorder %s22, 1
      %p40 = por %p38, %p39
      %p41 = scmp.ne.s32.totalorder %s30, %s31
      %p42 = scmp.eq.s32.totalorder %s22, 0
      %p43 = por %p41, %p42
      %p44 = scmp.ne.s32.totalorder %s30, %s31
      %p45 = scmp.eq.s32.totalorder %s23, 1
      %p46 = por %p44, %p45
      %p48 = scmp.ne.s32.totalorder %s31, %s47
      %p49 = scmp.eq.s32.totalorder %s23, 0
      %p50 = por %p48, %p49
      %s52 = sadd.s32 %s51, 1
      %p55 = scmp.eq.s32.totalorder %s17, 1
      %p56 = scmp.ne.s32.totalorder %s51, %s53
      %p57 = scmp.eq.s32.totalorder %s17, 0
      %p58 = por %p56, %p57
      %p59 = scmp.ne.s32.totalorder %s51, %s53
      %p60 = scmp.eq.s32.totalorder %s22, 1
      %p61 = por %p59, %p60
      %p62 = scmp.ne.s32.totalorder %s53, %s54
      %p63 = scmp.eq.s32.totalorder %s22, 0
      %p64 = por %p62, %p63
      %p65 = scmp.ne.s32.totalorder %s53, %s54
      %p66 = scmp.eq.s32.totalorder %s23, 1
      %p67 = por %p65, %p66
      %p69 = scmp.ne.s32.totalorder %s54, %s68
      %p70 = scmp.eq.s32.totalorder %s23, 0
      %p71 = por %p69, %p70
      %s73 = sadd.s32 %s72, 1
      %p76 = scmp.eq.s32.totalorder %s17, 1
      %p77 = scmp.ne.s32.totalorder %s72, %s74
      %p78 = scmp.eq.s32.totalorder %s17, 0
      %p79 = por %p77, %p78
      %p80 = scmp.ne.s32.totalorder %s72, %s74
      %p81 = scmp.eq.s32.totalorder %s22, 1
      %p82 = por %p80, %p81
      %p83 = scmp.ne.s32.totalorder %s74, %s75
      %p84 = scmp.eq.s32.totalorder %s22, 0
      %p85 = por %p83, %p84
      %p86 = scmp.ne.s32.totalorder %s74, %s75
      %p87 = scmp.eq.s32.totalorder %s23, 1
      %p88 = por %p86, %p87
      %p90 = scmp.ne.s32.totalorder %s75, %s89
      %p91 = scmp.eq.s32.totalorder %s23, 0
      %p92 = por %p90, %p91
      %s94 = sadd.s32 %s93, 1
      %p97 = scmp.eq.s32.totalorder %s17, 1
      %p98 = scmp.ne.s32.totalorder %s93, %s95
      %p99 = scmp.eq.s32.totalorder %s17, 0
      %p100 = por %p98, %p99
      %p101 = scmp.ne.s32.totalorder %s93, %s95
      %p102 = scmp.eq.s32.totalorder %s22, 1
      %p103 = por %p101, %p102
      %p104 = scmp.ne.s32.totalorder %s95, %s96
      %p105 = scmp.eq.s32.totalorder %s22, 0
      %p106 = por %p104, %p105
      %p107 = scmp.ne.s32.totalorder %s95, %s96
      %p108 = scmp.eq.s32.totalorder %s23, 1
      %p109 = por %p107, %p108
      %p111 = scmp.ne.s32.totalorder %s96, %s110
      %p112 = scmp.eq.s32.totalorder %s23, 0
      %p113 = por %p111, %p112
      %s115 = sadd.s32 %s114, 1
      %p118 = scmp.eq.s32.totalorder %s17, 1
      %p119 = scmp.ne.s32.totalorder %s114, %s116
      %p120 = scmp.eq.s32.totalorder %s17, 0
      %p121 = por %p119, %p120
      %p122 = scmp.ne.s32.totalorder %s114, %s116
      %p123 = scmp.eq.s32.totalorder %s22, 1
      %p124 = por %p122, %p123
      %p125 = scmp.ne.s32.totalorder %s116, %s117
      %p126 = scmp.eq.s32.totalorder %s22, 0
      %p127 = por %p125, %p126
      %p128 = scmp.ne.s32.totalorder %s116, %s117
      %p129 = scmp.eq.s32.totalorder %s23, 1
      %p130 = por %p128, %p129
      %p132 = scmp.ne.s32.totalorder %s117, %s131
      %p133 = scmp.eq.s32.totalorder %s23, 0
      %p134 = por %p132, %p133
      %s136 = sadd.s32 %s135, 1
      %p139 = scmp.eq.s32.totalorder %s17, 1
      %p140 = scmp.ne.s32.totalorder %s135, %s137
      %p141 = scmp.eq.s32.totalorder %s17, 0
      %p142 = por %p140, %p141
      %p143 = scmp.ne.s32.totalorder %s135, %s137
      %p144 = scmp.eq.s32.totalorder %s22, 1
      %p145 = por %p143, %p144
      %p146 = scmp.ne.s32.totalorder %s137, %s138
      %p147 = scmp.eq.s32.totalorder %s22, 0
      %p148 = por %p146, %p147
      %p149 = scmp.ne.s32.totalorder %s137, %s138
      %p150 = scmp.eq.s32.totalorder %s23, 1
      %p151 = por %p149, %p150
      %p153 = scmp.ne.s32.totalorder %s138, %s152
      %p154 = scmp.eq.s32.totalorder %s23, 0
      %p155 = por %p153, %p154
      %s157 = sadd.s32 %s156, 1
      %p160 = scmp.eq.s32.totalorder %s17, 1
      %p161 = scmp.ne.s32.totalorder %s156, %s158
      %p162 = scmp.eq.s32.totalorder %s17, 0
      %p163 = por %p161, %p162
      %p164 = scmp.ne.s32.totalorder %s156, %s158
      %p165 = scmp.eq.s32.totalorder %s22, 1
      %p166 = por %p164, %p165
      %p167 = scmp.ne.s32.totalorder %s158, %s159
      %p168 = scmp.eq.s32.totalorder %s22, 0
      %p169 = por %p167, %p168
      %p170 = scmp.ne.s32.totalorder %s158, %s159
      %p171 = scmp.eq.s32.totalorder %s23, 1
      %p172 = por %p170, %p171
      %p174 = scmp.ne.s32.totalorder %s159, %s173
      %p175 = scmp.eq.s32.totalorder %s23, 0
      %p176 = por %p174, %p175
      %s177 = ssub.s32 %s17, %s24
      %p178 = scmp.eq.s32.totalorder %s177, 0
      %s180 = sadd.s32 %s179, 1
      %s181 = scalar_select %p178, %s179, %s180
      %p184 = pneg %p178
      %p185 = scmp.eq.s32.totalorder %s17, 1
      %p186 = por %p184, %p185
      %p187 = scmp.ne.s32.totalorder %s179, %s182
      %p188 = scmp.eq.s32.totalorder %s17, 0
      %p189 = por %p187, %p188
      %p190 = scmp.ne.s32.totalorder %s179, %s182
      %p191 = scmp.eq.s32.totalorder %s22, 1
      %p192 = por %p190, %p191
      %p193 = scmp.ne.s32.totalorder %s182, %s183
      %p194 = scmp.eq.s32.totalorder %s22, 0
      %p195 = por %p193, %p194
      %p196 = scmp.ne.s32.totalorder %s182, %s183
      %p197 = scmp.eq.s32.totalorder %s23, 1
      %p198 = por %p196, %p197
      %p200 = scmp.ne.s32.totalorder %s183, %s199
      %p201 = scmp.eq.s32.totalorder %s23, 0
      %p202 = por %p200, %p201
      %p203 = scmp.le.s32.totalorder 1, %s17
      %p204 = scmp.lt.s32.totalorder %s17, 3
      %p205 = pnand %p203, %p204
      %p206 = pneg %p205
      // Predicated region
      $region9: #{tpu_custom_call.1} parent=5 // pred_check
        _
      $region10: #{tpu_custom_call.1} parent=5 // pred_check_branch
        %208 = sbr.rel (%p205) target = $region12
      $region11: #{tpu_custom_call.1} parent=5 // pred_region
        %s209 = ssub.s32 %s17, 1
        // Predicated region
        $region13: #{tpu_custom_call.1} parent=11 // pred_check
          %p210 = pneg %p64
        $region14: #{tpu_custom_call.1} parent=11 // pred_check_branch
          %212 = sbr.rel (%p210) target = $region16
        $region15: #{tpu_custom_call.1} parent=11 // pred_region
          _
        $region16: #{tpu_custom_call.1} parent=11 // pred_fallthru
          _
        // Predicated region
        $region17: #{tpu_custom_call.1} parent=11 // pred_check
          %p213 = pneg %p85
        $region18: #{tpu_custom_call.1} parent=11 // pred_check_branch
          %215 = sbr.rel (%p213) target = $region20
        $region19: #{tpu_custom_call.1} parent=11 // pred_region
          _
        $region20: #{tpu_custom_call.1} parent=11 // pred_fallthru
          _
        // Predicated region
        $region21: #{tpu_custom_call.1} parent=11 // pred_check
          %p216 = pneg %p106
        $region22: #{tpu_custom_call.1} parent=11 // pred_check_branch
          %218 = sbr.rel (%p216) target = $region24
        $region23: #{tpu_custom_call.1} parent=11 // pred_region
          _
        $region24: #{tpu_custom_call.1} parent=11 // pred_fallthru
          _
        // Predicated region
        $region25: #{tpu_custom_call.1} parent=11 // pred_check
          %p219 = pneg %p127
        $region26: #{tpu_custom_call.1} parent=11 // pred_check_branch
          %221 = sbr.rel (%p219) target = $region28
        $region27: #{tpu_custom_call.1} parent=11 // pred_region
          _
        $region28: #{tpu_custom_call.1} parent=11 // pred_fallthru
          _
        // Predicated region
        $region29: #{tpu_custom_call.1} parent=11 // pred_check
          %p222 = pneg %p148
        $region30: #{tpu_custom_call.1} parent=11 // pred_check_branch
          %224 = sbr.rel (%p222) target = $region32
        $region31: #{tpu_custom_call.1} parent=11 // pred_region
          %s226 = ssub.s32 2048, 2048
          %227 = vsyncadd [#allocation3], %s226
          %s228 = sshll.u32 [#allocation2], 4
          %s229 = int_to_ptr.vmem [resolvable:$true] %s228
          %234 = dma.hbm_to_vmem [thread:$0]  %s5, 2048, %s229, [#allocation3], 128, 128, 8
        $region32: #{tpu_custom_call.1} parent=11 // pred_fallthru
          _
        // Predicated region
        $region33: #{tpu_custom_call.1} parent=11 // pred_check
          %p235 = pneg %p169
        $region34: #{tpu_custom_call.1} parent=11 // pred_check_branch
          %237 = sbr.rel (%p235) target = $region36
        $region35: #{tpu_custom_call.1} parent=11 // pred_region
          _
        $region36: #{tpu_custom_call.1} parent=11 // pred_fallthru
          _
      $region12: #{tpu_custom_call.1} parent=5 // pred_fallthru
        _
      %p238 = scmp.lt.s32.totalorder %s17, 2
      // Predicated region
      $region37: #{tpu_custom_call.1} parent=5 // pred_check
        %p239 = pneg %p238
      $region38: #{tpu_custom_call.1} parent=5 // pred_check_branch
        %241 = sbr.rel (%p239) target = $region40
      $region39: #{tpu_custom_call.1} parent=5 // pred_region
        // Predicated region
        $region41: #{tpu_custom_call.1} parent=39 // pred_check
          %p242 = pneg %p37
        $region42: #{tpu_custom_call.1} parent=39 // pred_check_branch
          %244 = sbr.rel (%p242) target = $region44
        $region43: #{tpu_custom_call.1} parent=39 // pred_region
          %s245 = smul.u32 4, %s17
          %s246 = ssub.s32 7, %s245
          %p247 = scmp.lt.s32.totalorder %s246, 4
          %s248 = scalar_select %p247, %s246, 4
          %s249 = smul.u32 128, %s248
          %p250 = scmp.lt.s32.totalorder %s245, 6
          %s251 = scalar_select %p250, %s245, 6
          %s252 = smul.addr %s251, 8
          %s253 = scalar_lea.vmem %s0, %s252
          %s254 = smul.u32 4, %s17
          %s255 = ssub.s32 7, %s254
          %p256 = scmp.lt.s32.totalorder %s255, 4
          %s257 = scalar_select %p256, %s255, 4
          %s258 = smul.u32 128, %s257
        $region44: #{tpu_custom_call.1} parent=39 // pred_fallthru
          _
      $region40: #{tpu_custom_call.1} parent=5 // pred_fallthru
        _
      %p259 = scmp.le.s32.totalorder 1, %s17
      %p260 = scmp.lt.s32.totalorder %s17, 3
      %p261 = pnand %p259, %p260
      %p262 = pneg %p261
      // Predicated region
      $region45: #{tpu_custom_call.1} parent=5 // pred_check
        _
      $region46: #{tpu_custom_call.1} parent=5 // pred_check_branch
        %264 = sbr.rel (%p261) target = $region48
      $region47: #{tpu_custom_call.1} parent=5 // pred_region
        %s265 = ssub.s32 %s17, 1
        // Predicated region
        $region49: #{tpu_custom_call.1} parent=47 // pred_check
          %p266 = pneg %p148
        $region50: #{tpu_custom_call.1} parent=47 // pred_check_branch
          %268 = sbr.rel (%p266) target = $region52
        $region51: #{tpu_custom_call.1} parent=47 // pred_region
          %269 = dma.done [#allocation3], 2048
        $region52: #{tpu_custom_call.1} parent=47 // pred_fallthru
          _
        %s270 = smul.u32 4, %s22
        %s271 = ssub.s32 7, %s270
        %p272 = scmp.lt.s32.totalorder %s271, 4
        %s273 = scalar_select %p272, %s271, 4
        %s274 = smul.u32 128, %s273
        %p275 = scmp.lt.s32.totalorder %s270, 6
        %s276 = scalar_select %p275, %s270, 6
        %s277 = smul.addr %s276, 8
        %s278 = scalar_lea.vmem %s0, %s277
        %p279 = pneg %p43
        %p280 = pneg %p40
        %p281 = pneg %p64
        %p282 = pneg %p61
        %p283 = pneg %p85
        %p284 = pneg %p82
        %p285 = pneg %p106
        %p286 = pneg %p103
        %p287 = pneg %p127
        %p288 = pneg %p124
        %p289 = pneg %p148
        %p290 = pneg %p145
        %p291 = pneg %p169
        %p292 = pneg %p166
        %p293 = pneg %p195
        %p294 = pneg %p192
        %s295 = sand.u32 %s182, 1
        %s296 = scalar_lea.sflag [#allocation4], %s295
        %s297 = sand.u32 %s182, 1
        %s298 = smul.addr %s297, 32
        %s299 = scalar_lea.vmem [#allocation5], %s298
        %s300 = smul.u32 4, %s22
        %s301 = ssub.s32 7, %s300
        %p302 = scmp.lt.s32.totalorder %s301, 4
        %s303 = scalar_select %p302, %s301, 4
        %s304 = smul.u32 128, %s303
        %p305 = scmp.lt.s32.totalorder %s300, 6
        %s306 = scalar_select %p305, %s300, 6
        %s307 = smul.addr %s306, 8
        %s308 = scalar_lea.vmem %s0, %s307
        %s309 = smul.u32 4, %s22
        %s310 = ssub.s32 7, %s309
        %p311 = scmp.lt.s32.totalorder %s310, 4
        %s312 = scalar_select %p311, %s310, 4
        %s313 = smul.u32 128, %s312
        %s314 = smul.u32 4, %s22
        %s315 = ssub.s32 7, %s314
        %p316 = scmp.lt.s32.totalorder %s315, 4
        %s317 = scalar_select %p316, %s315, 4
        %s318 = smul.u32 128, %s317
        %v319 = vld [vmem:[%s308] sm:$0xff]
        %v320 = vld [vmem:[%s308 + $0x8] sm:$0xff]
        %v321 = vld [vmem:[%s308 + $0x10] sm:$0xff]
        %v322 = vld [vmem:[%s308 + $0x18] sm:$0xff]
        %v323 = vld [vmem:[%s1] sm:$0xff]
        %v324 = vld [vmem:[%s1 + $0x8] sm:$0xff]
        %v325 = vld [vmem:[%s1 + $0x10] sm:$0xff]
        %v326 = vld [vmem:[%s1 + $0x18] sm:$0xff]
        %v327 = vld [vmem:[%s2] sm:$0x1]
        %v329 = vlaneseq
        %v330 = vshrl.u32 %v329, 7
        %v331 = vsub.s32 0, %v330
        %v332 = vrot.slane %v327, %v331
        %vm334 = vcmask 261120
        %v336 = vsel %vm334, %v319, 0
        %v339 = vsel %vm334, %v320, 0
        %v342 = vsel %vm334, %v321, 0
        %v345 = vsel %vm334, %v322, 0
        %347 = vmatprep.subr.mxu0 0.0
        %348 = vmatpush1.msra.mxu0 %v323
        %349 = vmatprep.subr.mxu0 0.0
        %350 = vmatpush1.msra.mxu0 %v324
        %351 = vmatprep.subr.mxu0 0.0
        %352 = vmatpush1.msra.mxu0 %v325
        %353 = vmatprep.subr.mxu0 0.0
        %354 = vmatpush1.msra.mxu0 %v326
        %355 = vmatprep.subr.mxu0 0.0
        %356 = vmatpush1.msra.mxu0 0.0
        %357 = vmatprep.subr.mxu0 0.0
        %358 = vmatpush1.msra.mxu0 0.0
        %359 = vmatprep.subr.mxu0 0.0
        %360 = vmatpush1.msra.mxu0 0.0
        %361 = vmatprep.subr.mxu0 0.0
        %362 = vmatpush1.msra.mxu0 0.0
        %363 = vmatprep.subr.mxu0 0.0
        %364 = vmatpush1.msra.mxu0 0.0
        %365 = vmatprep.subr.mxu0 0.0
        %366 = vmatpush1.msra.mxu0 0.0
        %367 = vmatprep.subr.mxu0 0.0
        %368 = vmatpush1.msra.mxu0 0.0
        %369 = vmatprep.subr.mxu0 0.0
        %370 = vmatpush1.msra.mxu0 0.0
        %371 = vmatprep.subr.mxu0 0.0
        %372 = vmatpush1.msra.mxu0 0.0
        %373 = vmatprep.subr.mxu0 0.0
        %374 = vmatpush1.msra.mxu0 0.0
        %375 = vmatprep.subr.mxu0 0.0
        %376 = vmatpush1.msra.mxu0 0.0
        %377 = vmatprep.subr.mxu0 0.0
        %378 = vmatpush1.msra.mxu0 0.0
        %379 = vmatprep.subr.mxu0 0.0
        %380 = vmatpush1.msra.mxu0 0.0
        %381 = vmatprep.subr.mxu0 0.0
        %382 = vmatpush1.msra.mxu0 0.0
        %383 = vmatprep.subr.mxu0 0.0
        %384 = vmatpush1.msra.mxu0 0.0
        %385 = vmatprep.subr.mxu0 0.0
        %386 = vmatpush1.msra.mxu0 0.0
        %387 = vmatprep.subr.mxu0 0.0
        %388 = vmatpush1.msra.mxu0 0.0
        %389 = vmatprep.subr.mxu0 0.0
        %390 = vmatpush1.msra.mxu0 0.0
        %391 = vmatprep.subr.mxu0 0.0
        %392 = vmatpush1.msra.mxu0 0.0
        %393 = vmatprep.subr.mxu0 0.0
        %394 = vmatpush1.msra.mxu0 0.0
        %395 = vmatprep.subr.mxu0 0.0
        %396 = vmatpush1.msra.mxu0 0.0
        %397 = vmatprep.subr.mxu0 0.0
        %398 = vmatpush1.msra.mxu0 0.0
        %399 = vmatprep.subr.mxu0 0.0
        %400 = vmatpush1.msra.mxu0 0.0
        %401 = vmatprep.subr.mxu0 0.0
        %402 = vmatpush1.msra.mxu0 0.0
        %403 = vmatprep.subr.mxu0 0.0
        %404 = vmatpush1.msra.mxu0 0.0
        %405 = vmatprep.subr.mxu0 0.0
        %406 = vmatpush1.msra.mxu0 0.0
        %407 = vmatprep.subr.mxu0 0.0
        %408 = vmatpush1.msra.mxu0 0.0
        %409 = vmatprep.subr.mxu0 0.0
        %410 = vmatpush1.msra.mxu0 0.0
        %411 = vmatprep.mubr.f32.mxu0 0.0
        %412 = vmatmul.mubr.f32.gmra.mrb[0].mxu0 %v336
        %v413 = vpop.f32.mrb[0].mxu0
        %v414 = vadd.f32 %v332, %v413
        %v415 = vpop.f32.mrb[0].mxu0
        %416 = vmatprep.mubr.f32.mxu0 0.0
        %417 = vmatmul.mubr.f32.gmra.mrb[0].mxu0 %v339
        %v418 = vpop.f32.mrb[0].mxu0
        %v419 = vadd.f32 %v332, %v418
        %v420 = vpop.f32.mrb[0].mxu0
        %421 = vmatprep.mubr.f32.mxu0 0.0
        %422 = vmatmul.mubr.f32.gmra.mrb[0].mxu0 %v342
        %v423 = vpop.f32.mrb[0].mxu0
        %v424 = vadd.f32 %v332, %v423
        %v425 = vpop.f32.mrb[0].mxu0
        %426 = vmatprep.mubr.f32.mxu0 0.0
        %427 = vmatmul.mubr.f32.gmra.mrb[0].mxu0 %v345
        %v428 = vpop.f32.mrb[0].mxu0
        %v429 = vadd.f32 %v332, %v428
        %v430 = vpop.f32.mrb[0].mxu0
        %431 = vdwg.mxu0
        %432 = vadd.xlane.f32.xlu0 %v414
        %v433 = vpop.xlane.xlu0 %432
        %434 = vadd.xlane.f32.xlu0 %v419
        %v435 = vpop.xlane.xlu0 %434
        %436 = vadd.xlane.f32.xlu0 %v424
        %v437 = vpop.xlane.xlu0 %436
        %438 = vadd.xlane.f32.xlu0 %v429
        %v439 = vpop.xlane.xlu0 %438
        %v440 = vmul.f32 %v414, %v414
        %v441 = vmul.f32 %v419, %v419
        %v442 = vmul.f32 %v424, %v424
        %v443 = vmul.f32 %v429, %v429
        %444 = vadd.xlane.f32.xlu0 %v440
        %v445 = vpop.xlane.xlu0 %444
        %446 = vadd.xlane.f32.xlu0 %v441
        %v447 = vpop.xlane.xlu0 %446
        %448 = vadd.xlane.f32.xlu0 %v442
        %v449 = vpop.xlane.xlu0 %448
        %450 = vadd.xlane.f32.xlu0 %v443
        %v451 = vpop.xlane.xlu0 %450
        %v452 = vmul.f32 %v433, 0.0078125
        %v453 = vmul.f32 %v435, 0.0078125
        %v454 = vmul.f32 %v437, 0.0078125
        %v455 = vmul.f32 %v439, 0.0078125
        %v456 = vmul.f32 %v445, 0.0078125
        %v457 = vmul.f32 %v447, 0.0078125
        %v458 = vmul.f32 %v449, 0.0078125
        %v459 = vmul.f32 %v451, 0.0078125
        %v460 = vmul.f32 %v452, %v452
        %v461 = vmul.f32 %v453, %v453
        %v462 = vmul.f32 %v454, %v454
        %v463 = vmul.f32 %v455, %v455
        %v464 = vsub.f32 %v456, %v460
        %v465 = vsub.f32 %v457, %v461
        %v466 = vsub.f32 %v458, %v462
        %v467 = vsub.f32 %v459, %v463
        %v468 = vmax.f32 %v464, 0.0
        %v469 = vmax.f32 %v465, 0.0
        %v470 = vmax.f32 %v466, 0.0
        %v471 = vmax.f32 %v467, 0.0
        %v472 = vsub.f32 %v414, %v452
        %v473 = vsub.f32 %v419, %v453
        %v474 = vsub.f32 %v424, %v454
        %v475 = vsub.f32 %v429, %v455
        %v476 = vadd.f32 %v468, 1e-05
        %v477 = vadd.f32 %v469, 1e-05
        %v478 = vadd.f32 %v470, 1e-05
        %v479 = vadd.f32 %v471, 1e-05
        %v480 = vrsqrt.pop %v476
        %v481 = vrsqrt.pop %v477
        %v482 = vrsqrt.pop %v478
        %v483 = vrsqrt.pop %v479
        %v484 = vmul.f32 %v472, %v480
        %v485 = vmul.f32 %v473, %v481
        %v486 = vmul.f32 %v474, %v482
        %v487 = vmul.f32 %v475, %v483
        %v488 = vld [vmem:[%s3] sm:$0x1]
        %v490 = vlaneseq
        %v491 = vshrl.u32 %v490, 7
        %v492 = vsub.s32 0, %v491
        %v493 = vrot.slane %v488, %v492
        %v495 = vmul.f32 %v484, %v493
        %v496 = vmul.f32 %v485, %v493
        %v497 = vmul.f32 %v486, %v493
        %v498 = vmul.f32 %v487, %v493
        %v499 = vld [vmem:[%s4] sm:$0x1]
        %v501 = vlaneseq
        %v502 = vshrl.u32 %v501, 7
        %v503 = vsub.s32 0, %v502
        %v504 = vrot.slane %v499, %v503
        %v506 = vadd.f32 %v495, %v504
        %v507 = vadd.f32 %v496, %v504
        %v508 = vadd.f32 %v497, %v504
        %v509 = vadd.f32 %v498, %v504
        %v510 = vmax.f32 %v506, 0.0
        %v511 = vmax.f32 %v507, 0.0
        %v512 = vmax.f32 %v508, 0.0
        %v513 = vmax.f32 %v509, 0.0
        %v514 = vld [vmem:[#allocation2] sm:$0xff]
        %v515 = vld [vmem:[#allocation2 + $0x8] sm:$0xff]
        %v516 = vld [vmem:[#allocation2 + $0x10] sm:$0xff]
        %v517 = vld [vmem:[#allocation2 + $0x18] sm:$0xff]
        %v518 = vld [vmem:[#allocation2 + $0x20] sm:$0xff]
        %v519 = vld [vmem:[#allocation2 + $0x28] sm:$0xff]
        %v520 = vld [vmem:[#allocation2 + $0x30] sm:$0xff]
        %v521 = vld [vmem:[#allocation2 + $0x38] sm:$0xff]
        %v522 = vld [vmem:[#allocation2 + $0x40] sm:$0xff]
        %v523 = vld [vmem:[#allocation2 + $0x48] sm:$0xff]
        %v524 = vld [vmem:[#allocation2 + $0x50] sm:$0xff]
        %v525 = vld [vmem:[#allocation2 + $0x58] sm:$0xff]
        %v526 = vld [vmem:[#allocation2 + $0x60] sm:$0xff]
        %v527 = vld [vmem:[#allocation2 + $0x68] sm:$0xff]
        %v528 = vld [vmem:[#allocation2 + $0x70] sm:$0xff]
        %v529 = vld [vmem:[#allocation2 + $0x78] sm:$0xff]
        %v530 = vld [vmem:[%s6] sm:$0x1]
        %v532 = vlaneseq
        %v533 = vshrl.u32 %v532, 7
        %v534 = vsub.s32 0, %v533
        %v535 = vrot.slane %v530, %v534
        %537 = vmatprep.subr.mxu0 0.0
        %538 = vmatpush1.msra.mxu0 %v514
        %539 = vmatprep.subr.mxu0 0.0
        %540 = vmatpush1.msra.mxu0 %v515
        %541 = vmatprep.subr.mxu0 0.0
        %542 = vmatpush1.msra.mxu0 %v516
        %543 = vmatprep.subr.mxu0 0.0
        %544 = vmatpush1.msra.mxu0 %v517
        %545 = vmatprep.subr.mxu0 0.0
        %546 = vmatpush1.msra.mxu0 %v518
        %547 = vmatprep.subr.mxu0 0.0
        %548 = vmatpush1.msra.mxu0 %v519
        %549 = vmatprep.subr.mxu0 0.0
        %550 = vmatpush1.msra.mxu0 %v520
        %551 = vmatprep.subr.mxu0 0.0
        %552 = vmatpush1.msra.mxu0 %v521
        %553 = vmatprep.subr.mxu0 0.0
        %554 = vmatpush1.msra.mxu0 %v522
        %555 = vmatprep.subr.mxu0 0.0
        %556 = vmatpush1.msra.mxu0 %v523
        %557 = vmatprep.subr.mxu0 0.0
        %558 = vmatpush1.msra.mxu0 %v524
        %559 = vmatprep.subr.mxu0 0.0
        %560 = vmatpush1.msra.mxu0 %v525
        %561 = vmatprep.subr.mxu0 0.0
        %562 = vmatpush1.msra.mxu0 %v526
        %563 = vmatprep.subr.mxu0 0.0
        %564 = vmatpush1.msra.mxu0 %v527
        %565 = vmatprep.subr.mxu0 0.0
        %566 = vmatpush1.msra.mxu0 %v528
        %567 = vmatprep.subr.mxu0 0.0
        %568 = vmatpush1.msra.mxu0 %v529
        %569 = vmatprep.subr.mxu0 0.0
        %570 = vmatpush1.msra.mxu0 0.0
        %571 = vmatprep.subr.mxu0 0.0
        %572 = vmatpush1.msra.mxu0 0.0
        %573 = vmatprep.subr.mxu0 0.0
        %574 = vmatpush1.msra.mxu0 0.0
        %575 = vmatprep.subr.mxu0 0.0
        %576 = vmatpush1.msra.mxu0 0.0
        %577 = vmatprep.subr.mxu0 0.0
        %578 = vmatpush1.msra.mxu0 0.0
        %579 = vmatprep.subr.mxu0 0.0
        %580 = vmatpush1.msra.mxu0 0.0
        %581 = vmatprep.subr.mxu0 0.0
        %582 = vmatpush1.msra.mxu0 0.0
        %583 = vmatprep.subr.mxu0 0.0
        %584 = vmatpush1.msra.mxu0 0.0
        %585 = vmatprep.subr.mxu0 0.0
        %586 = vmatpush1.msra.mxu0 0.0
        %587 = vmatprep.subr.mxu0 0.0
        %588 = vmatpush1.msra.mxu0 0.0
        %589 = vmatprep.subr.mxu0 0.0
        %590 = vmatpush1.msra.mxu0 0.0
        %591 = vmatprep.subr.mxu0 0.0
        %592 = vmatpush1.msra.mxu0 0.0
        %593 = vmatprep.subr.mxu0 0.0
        %594 = vmatpush1.msra.mxu0 0.0
        %595 = vmatprep.subr.mxu0 0.0
        %596 = vmatpush1.msra.mxu0 0.0
        %597 = vmatprep.subr.mxu0 0.0
        %598 = vmatpush1.msra.mxu0 0.0
        %599 = vmatprep.subr.mxu0 0.0
        %600 = vmatpush1.msra.mxu0 0.0
        %601 = vmatprep.mubr.f32.mxu0 0.0
        %602 = vmatmul.mubr.f32.gmra.mrb[0].mxu0 %v510
        %v603 = vpop.f32.mrb[0].mxu0
        %v604 = vadd.f32 %v535, %v603
        %v605 = vpop.f32.mrb[0].mxu0
        %606 = vmatprep.mubr.f32.mxu0 0.0
        %607 = vmatmul.mubr.f32.gmra.mrb[0].mxu0 %v511
        %v608 = vpop.f32.mrb[0].mxu0
        %v609 = vadd.f32 %v535, %v608
        %v610 = vpop.f32.mrb[0].mxu0
        %611 = vmatprep.mubr.f32.mxu0 0.0
        %612 = vmatmul.mubr.f32.gmra.mrb[0].mxu0 %v512
        %v613 = vpop.f32.mrb[0].mxu0
        %v614 = vadd.f32 %v535, %v613
        %v615 = vpop.f32.mrb[0].mxu0
        %616 = vmatprep.mubr.f32.mxu0 0.0
        %617 = vmatmul.mubr.f32.gmra.mrb[0].mxu0 %v513
        %v618 = vpop.f32.mrb[0].mxu0
        %v619 = vadd.f32 %v535, %v618
        %v620 = vpop.f32.mrb[0].mxu0
        %621 = vdwg.mxu0
        %622 = vst [vmem:[%s299] sm:$0xff] %v604
        %623 = vst [vmem:[%s299 + $0x8] sm:$0xff] %v609
        %624 = vst [vmem:[%s299 + $0x10] sm:$0xff] %v614
        %625 = vst [vmem:[%s299 + $0x18] sm:$0xff] %v619
        %s626 = sand.u32 %s182, 1
        %s627 = scalar_lea.sflag [#allocation4], %s626
        %s628 = sand.u32 %s182, 1
        %s629 = smul.addr %s628, 32
        %s630 = scalar_lea.vmem [#allocation5], %s629
        // Predicated region
        $region53: #{tpu_custom_call.1} parent=47 // pred_check
          %p631 = pneg %p192
        $region54: #{tpu_custom_call.1} parent=47 // pred_check_branch
          %633 = sbr.rel (%p631) target = $region56
        $region55: #{tpu_custom_call.1} parent=47 // pred_region
          %s634 = smul.u32 4, %s22
          %s635 = ssub.s32 7, %s634
          %p636 = scmp.lt.s32.totalorder %s635, 4
          %s637 = scalar_select %p636, %s635, 4
          %s638 = smul.u32 128, %s637
          %s640 = ssub.s32 512, %s638
          %641 = vsyncadd %s627, %s640
          %p642 = scmp.ne.s32.totalorder 0, %s638
          %s643 = smul.addr %s634, 128
          %s644 = scalar_lea.hbm %s7, %s643
          %s645 = smul.u32 8, %s637
          %s646 = sshll.u32 %s630, 4
          %s647 = int_to_ptr.vmem [resolvable:$true] %s646
          %s648 = sshll.u32 %s645, 4
          %652 = dma.vmem_to_hbm [thread:$0]  (%p642), %s647, %s648, %s644, %s627, 128, 128, 8
        $region56: #{tpu_custom_call.1} parent=47 // pred_fallthru
          _
      $region48: #{tpu_custom_call.1} parent=5 // pred_fallthru
        _
      %p653 = scmp.le.s32.totalorder 2, %s17
      // Predicated region
      $region57: #{tpu_custom_call.1} parent=5 // pred_check
        %p654 = pneg %p653
      $region58: #{tpu_custom_call.1} parent=5 // pred_check_branch
        %656 = sbr.rel (%p654) target = $region60
      $region59: #{tpu_custom_call.1} parent=5 // pred_region
        %s657 = ssub.s32 %s17, 2
        // Predicated region
        $region61: #{tpu_custom_call.1} parent=59 // pred_check
          %p658 = pneg %p198
        $region62: #{tpu_custom_call.1} parent=59 // pred_check_branch
          %660 = sbr.rel (%p658) target = $region64
        $region63: #{tpu_custom_call.1} parent=59 // pred_region
          %s661 = sand.u32 %s183, 1
          %s662 = scalar_lea.sflag [#allocation4], %s661
          %s663 = sand.u32 %s183, 1
          %s664 = smul.addr %s663, 32
          %s665 = scalar_lea.vmem [#allocation5], %s664
          %666 = dma.done %s662, 512
        $region64: #{tpu_custom_call.1} parent=59 // pred_fallthru
          _
      $region60: #{tpu_custom_call.1} parent=5 // pred_fallthru
        _
    $region6: #{tpu_custom_call.1} parent=1 // loop_footer
      %s21 = sadd.s32 1, %s17
    $region7: #{tpu_custom_call.1} parent=1 // loop_footer_branch
      %16 = sbr.rel target = $region3
    $region8: #{tpu_custom_call.1} parent=1 // loop_exit
      _
    %667 = vsyncpa [#allocation3], 1
    %s668 = scalar_lea.sflag [#allocation3], 1
    %669 = vsyncpa %s668, 1
    %670 = vsyncpa [#allocation4], 1
    %s671 = scalar_lea.sflag [#allocation4], 1
    %672 = vsyncpa %s671, 1

</llo_original>
